<compile_context>
chip_gen: v6e
topology: v6e:2x2x1
jax: 0.10.0
libtpu: 0.0.40
codegen_flags: <defaults>
</compile_context>

<pallas_src>
import functools

import jax
import jax.numpy as jnp
from jax.experimental import pallas as pl
from jax.experimental.pallas import tpu as pltpu


def _layernorm(v, g, b, eps=1e-5):
    mu = jnp.mean(v, axis=-1, keepdims=True)
    var = jnp.mean((v - mu) ** 2, axis=-1, keepdims=True)
    return (v - mu) * jax.lax.rsqrt(var + eps) * g + b


def block_kernel(x_ref, y_ref, bias_ref,
                 g1x_ref, b1x_ref, g1y_ref, b1y_ref,
                 wq_ref, wkv_ref, wo_ref, bo_ref,
                 g2_ref, b2_ref, w1_ref, bm1_ref, w2_ref, bm2_ref,
                 o_ref, *, heads, dim_head, block_b, n_x, n_y, mm_dtype):
    f32 = jnp.float32
    exact = jnp.dtype(mm_dtype) == jnp.dtype(jnp.float32)
    inner = heads * dim_head

    # ---- hoisted single reads of every parameter ----
    g1x, b1x = g1x_ref[...], b1x_ref[...]
    g1y, b1y = g1y_ref[...], b1y_ref[...]
    g2, b2 = g2_ref[...], b2_ref[...]
    bo, bm1, bm2 = bo_ref[...], bm1_ref[...], bm2_ref[...]
    wq, wkv, wo = wq_ref[...], wkv_ref[...], wo_ref[...]        # already mm_dtype
    w1, w2 = w1_ref[...], w2_ref[...]

    xf = x_ref[...].astype(f32)            # (block_b*n_x, C) residual stream, kept f32
    yf = y_ref[...].astype(f32)            # (block_b*n_y, C)
    bias = bias_ref[...]                   # (block_b, 1, n_y) additive mask bias, f32

    # ---------------- part 1: cross attention + residual ----------------
    nx = _layernorm(xf, g1x, b1x)
    ny = _layernorm(yf, g1y, b1y)

    # Full-width projections: one matmul for q (N=inner), one fused matmul for k|v (N=2*inner).
    # (Attention scale is already folded into wq by the wrapper.)
    q2 = jnp.dot(nx.astype(mm_dtype), wq, preferred_element_type=f32)    # (bn_x, inner)
    kv = jnp.dot(ny.astype(mm_dtype), wkv, preferred_element_type=f32)   # (bn_y, 2*inner)

    # Per-head attention core (heads is small; the score/PV matmuls are inherently tiny
    # regardless of batching).  Lane slices / reshapes are layout-preserving because
    # n_x and n_y are multiples of 8.
    head_outs = []
    for h in range(heads):
        lo, hi = h * dim_head, (h + 1) * dim_head
        qh = q2[:, lo:hi].reshape(block_b, n_x, dim_head)
        kh = kv[:, lo:hi].reshape(block_b, n_y, dim_head)
        vh = kv[:, inner + lo:inner + hi].reshape(block_b, n_y, dim_head)

        s = jnp.einsum('bnd,bmd->bnm', qh.astype(mm_dtype), kh.astype(mm_dtype),
                       preferred_element_type=f32) + bias                # (Bt, n_x, n_y)
        s = s - jnp.max(s, axis=-1, keepdims=True)
        p = jnp.exp(s)
        denom = jnp.sum(p, axis=-1, keepdims=True)
        if exact:
            p = p / denom
        else:
            p = p * pl.reciprocal(denom, approx=True)
        oh = jnp.einsum('bnm,bmd->bnd', p.astype(mm_dtype), vh.astype(mm_dtype),
                        preferred_element_type=f32)                      # (Bt, n_x, Dh)
        head_outs.append(oh.reshape(block_b * n_x, dim_head))

    # Fused output projection: lane-concat the per-head outputs, then one K=inner matmul.
    o_cat = jnp.concatenate(head_outs, axis=-1)                          # (bn_x, inner)
    attn = jnp.dot(o_cat.astype(mm_dtype), wo, preferred_element_type=f32) + bo
    x1 = xf + attn                                                       # residual 1

    # ---------------- part 2: MLP + residual ----------------
    n2 = _layernorm(x1, g2, b2)
    hid = jnp.dot(n2.astype(mm_dtype), w1, preferred_element_type=f32) + bm1
    hid = 0.5 * hid * (1.0 + jax.lax.erf(hid * (1.0 / jnp.sqrt(2.0))))   # exact GELU (nn.GELU)
    mlp = jnp.dot(hid.astype(mm_dtype), w2, preferred_element_type=f32) + bm2
    o_ref[...] = (x1 + mlp).astype(o_ref.dtype)


def cross_attn_transformer_block(x, y, pad_mask, params, *, heads, dim_head,
                                 matmul_dtype=jnp.bfloat16, block_b=None):
    """Fused CrossAttnTransformerBlock forward.
    x: (B, Nx, C), y: (B, Ny, C), pad_mask: (B, 1, Ny) (1.0 = attend, 0.0 = padded key)."""
    B, Nx, C = x.shape
    _, Ny, _ = y.shape
    mm = matmul_dtype
    scale = 1.0 / (dim_head ** 0.5)

    if block_b is None:
        # Prefer >= 2 grid steps (>= 4 when the batch allows) so the pipeline has work to
        # overlap and v7x's two TensorCores both get blocks.
        target_steps = 4 if B >= 4 else max(B, 1)
        block_b = 1
        for d in range(1, B + 1):
            if B % d == 0 and B // d >= target_steps:
                block_b = d
    assert B % block_b == 0, "block_b must divide the batch"
    # BlockSpec rule: second-minor block dims must be multiples of 8 or cover the full array.
    assert (block_b * Nx) % 8 == 0 or block_b == B
    assert (block_b * Ny) % 8 == 0 or block_b == B

    # Weights prepared once outside the kernel; attention scale folded into wq; k|v fused.
    wq_s = (params['wq'] * scale).astype(mm)                             # (C, inner)
    wkv = jnp.concatenate([params['wk'], params['wv']], axis=1).astype(mm)  # (C, 2*inner)
    wo = params['wo'].astype(mm)                                         # (inner, C)
    w1 = params['w1'].astype(mm)
    w2 = params['w2'].astype(mm)

    weights = [params['g1x'], params['b1x'], params['g1y'], params['b1y'],
               wq_s, wkv, wo, params['bo'],
               params['g2'], params['b2'], w1, params['bm1'], w2, params['bm2']]

    # Pad mask -> additive bias, computed once in the wrapper.
    mask_bias = jnp.where(pad_mask > 0.5, 0.0, -1e9).astype(jnp.float32)  # (B, 1, Ny)

    # Flatten (batch, tokens) so the residual / LN / MLP path runs on one 2-D slab per block.
    xf = x.reshape(B * Nx, C)
    yf = y.reshape(B * Ny, C)

    grid = (B // block_b,)
    in_specs = [
        pl.BlockSpec((block_b * Nx, C), lambda i: (i, 0)),
        pl.BlockSpec((block_b * Ny, C), lambda i: (i, 0)),
        pl.BlockSpec((block_b, 1, Ny), lambda i: (i, 0, 0)),
    ] + [pl.BlockSpec(w.shape, lambda i, nd=w.ndim: (0,) * nd) for w in weights]

    kernel = functools.partial(block_kernel, heads=heads, dim_head=dim_head,
                               block_b=block_b, n_x=Nx, n_y=Ny, mm_dtype=mm)
    out_flat = pl.pallas_call(
        kernel,
        out_shape=jax.ShapeDtypeStruct((B * Nx, C), jnp.float32),
        grid_spec=pltpu.PrefetchScalarGridSpec(
            num_scalar_prefetch=0,
            grid=grid,
            in_specs=in_specs,
            out_specs=pl.BlockSpec((block_b * Nx, C), lambda i: (i, 0)),
        ),
        # Batch blocks are independent -> "parallel" lets v7x split them across its 2 TCs.
        compiler_params=pltpu.CompilerParams(
            dimension_semantics=("parallel",),
            vmem_limit_bytes=64 * 1024 * 1024),
    )(xf, yf, mask_bias, *weights)
    return out_flat.reshape(B, Nx, C)


def reference(x, y, mask, p, heads, dim_head):
    B, Nx, C = x.shape
    Ny = y.shape[1]
    nx = _layernorm(x, p['g1x'], p['b1x'])
    ny = _layernorm(y, p['g1y'], p['b1y'])
    q = (nx @ p['wq']).reshape(B, Nx, heads, dim_head).transpose(0, 2, 1, 3)
    k = (ny @ p['wk']).reshape(B, Ny, heads, dim_head).transpose(0, 2, 1, 3)
    v = (ny @ p['wv']).reshape(B, Ny, heads, dim_head).transpose(0, 2, 1, 3)
    s = jnp.einsum('bhnd,bhmd->bhnm', q, k) / (dim_head ** 0.5)
    s = jnp.where(mask[:, None, :, :] > 0.5, s, -1e9)
    a = jax.nn.softmax(s, axis=-1)
    o = jnp.einsum('bhnm,bhmd->bhnd', a, v).transpose(0, 2, 1, 3).reshape(B, Nx, heads * dim_head)
    x1 = x + o @ p['wo'] + p['bo']
    n2 = _layernorm(x1, p['g2'], p['b2'])
    h = n2 @ p['w1'] + p['bm1']
    h = 0.5 * h * (1.0 + jax.lax.erf(h / jnp.sqrt(2.0)))
    return x1 + h @ p['w2'] + p['bm2']


if __name__ == "__main__":
    # module config: dim=32, heads=4, dim_head=8, mlp_ratio=4.0, dropout=0, path_dropout=0
    B, Nx, Ny, C = 2, 16, 8, 32
    heads, dim_head = 4, 8
    mlp_dim = int(C * 4.0)
    inner = heads * dim_head

    key = jax.random.PRNGKey(0)
    ks = jax.random.split(key, 10)

    def rnd(k, shape):
        return (0.02 * jax.random.normal(k, shape)).astype(jnp.float32)

    params = {
        'g1x': jnp.ones((1, C), jnp.float32), 'b1x': jnp.zeros((1, C), jnp.float32),
        'g1y': jnp.ones((1, C), jnp.float32), 'b1y': jnp.zeros((1, C), jnp.float32),
        'wq': rnd(ks[0], (C, inner)), 'wk': rnd(ks[1], (C, inner)), 'wv': rnd(ks[2], (C, inner)),
        'wo': rnd(ks[3], (inner, C)), 'bo': jnp.zeros((1, C), jnp.float32),
        'g2': jnp.ones((1, C), jnp.float32), 'b2': jnp.zeros((1, C), jnp.float32),
        'w1': rnd(ks[4], (C, mlp_dim)), 'bm1': jnp.zeros((1, mlp_dim), jnp.float32),
        'w2': rnd(ks[5], (mlp_dim, C)), 'bm2': jnp.zeros((1, C), jnp.float32),
    }

    x = jax.random.normal(ks[6], (B, Nx, C), jnp.float32)
    y = jax.random.normal(ks[7], (B, Ny, C), jnp.float32)
    # pad_mask: last 2 keys of batch 1 are padding
    pad_mask = jnp.ones((B, 1, Ny), jnp.float32).at[1, 0, -2:].set(0.0)

    ref = reference(x, y, pad_mask, params, heads, dim_head)

    # 1) full-precision matmul path, default block_b (grid has 2 "parallel" steps) -- strict
    out_f32 = cross_attn_transformer_block(x, y, pad_mask, params, heads=heads,
                                           dim_head=dim_head, matmul_dtype=jnp.float32)
    out_f32 = jax.block_until_ready(out_f32)
    if not jnp.allclose(out_f32, ref, atol=1e-4, rtol=1e-4):
        raise AssertionError("f32 Pallas output mismatch vs reference")

    # 2) bf16 matmul inputs (f32 accumulation, f32 elementwise math) -- looser tolerance
    out_bf16 = cross_attn_transformer_block(x, y, pad_mask, params, heads=heads,
                                            dim_head=dim_head, matmul_dtype=jnp.bfloat16)
    out_bf16 = jax.block_until_ready(out_bf16)
    if not jnp.allclose(out_bf16, ref, atol=5e-3, rtol=5e-3):
        raise AssertionError("bf16 Pallas output mismatch vs reference")

    # 3) whole batch in one block (block_b=B -> grid=(1,)) to exercise the single-step path
    out_full = cross_attn_transformer_block(x, y, pad_mask, params, heads=heads,
                                            dim_head=dim_head, matmul_dtype=jnp.bfloat16,
                                            block_b=B)
    out_full = jax.block_until_ready(out_full)
    if not jnp.allclose(out_full, ref, atol=5e-3, rtol=5e-3):
        raise AssertionError("full-block Pallas output mismatch vs reference")

    print("KERNEL_OK")
</pallas_src>

<mosaic_0001>
module attributes {stable_mosaic.version = 11 : i64} {
  func.func @block_kernel(%arg0: i32, %arg1: memref<16x32xf32, #tpu.memory_space<vmem>>, %arg2: memref<8x32xf32, #tpu.memory_space<vmem>>, %arg3: memref<1x1x8xf32, #tpu.memory_space<vmem>>, %arg4: memref<1x32xf32, #tpu.memory_space<vmem>>, %arg5: memref<1x32xf32, #tpu.memory_space<vmem>>, %arg6: memref<1x32xf32, #tpu.memory_space<vmem>>, %arg7: memref<1x32xf32, #tpu.memory_space<vmem>>, %arg8: memref<32x32xf32, #tpu.memory_space<vmem>>, %arg9: memref<32x64xf32, #tpu.memory_space<vmem>>, %arg10: memref<32x32xf32, #tpu.memory_space<vmem>>, %arg11: memref<1x32xf32, #tpu.memory_space<vmem>>, %arg12: memref<1x32xf32, #tpu.memory_space<vmem>>, %arg13: memref<1x32xf32, #tpu.memory_space<vmem>>, %arg14: memref<32x128xf32, #tpu.memory_space<vmem>>, %arg15: memref<1x128xf32, #tpu.memory_space<vmem>>, %arg16: memref<128x32xf32, #tpu.memory_space<vmem>>, %arg17: memref<1x32xf32, #tpu.memory_space<vmem>>, %arg18: memref<16x32xf32, #tpu.memory_space<vmem>>) attributes {dimension_semantics = [#tpu.dimension_semantics<parallel>], iteration_bounds = array<i64: 2>, scalar_prefetch = 0 : i64, scratch_operands = 0 : i64, tpu.core_type = #tpu.core_type<tc>, window_params = [{transform_indices = @transform_0, window_bounds = array<i64: 16, 32>}, {transform_indices = @transform_1, window_bounds = array<i64: 8, 32>}, {transform_indices = @transform_2, window_bounds = array<i64: 1, 1, 8>}, {pipeline_mode = #tpu.pipeline_mode<synchronous>, transform_indices = @transform_3, window_bounds = array<i64: 1, 32>}, {pipeline_mode = #tpu.pipeline_mode<synchronous>, transform_indices = @transform_4, window_bounds = array<i64: 1, 32>}, {pipeline_mode = #tpu.pipeline_mode<synchronous>, transform_indices = @transform_5, window_bounds = array<i64: 1, 32>}, {pipeline_mode = #tpu.pipeline_mode<synchronous>, transform_indices = @transform_6, window_bounds = array<i64: 1, 32>}, {pipeline_mode = #tpu.pipeline_mode<synchronous>, transform_indices = @transform_7, window_bounds = array<i64: 32, 32>}, {pipeline_mode = #tpu.pipeline_mode<synchronous>, transform_indices = @transform_8, window_bounds = array<i64: 32, 64>}, {pipeline_mode = #tpu.pipeline_mode<synchronous>, transform_indices = @transform_9, window_bounds = array<i64: 32, 32>}, {pipeline_mode = #tpu.pipeline_mode<synchronous>, transform_indices = @transform_10, window_bounds = array<i64: 1, 32>}, {pipeline_mode = #tpu.pipeline_mode<synchronous>, transform_indices = @transform_11, window_bounds = array<i64: 1, 32>}, {pipeline_mode = #tpu.pipeline_mode<synchronous>, transform_indices = @transform_12, window_bounds = array<i64: 1, 32>}, {pipeline_mode = #tpu.pipeline_mode<synchronous>, transform_indices = @transform_13, window_bounds = array<i64: 32, 128>}, {pipeline_mode = #tpu.pipeline_mode<synchronous>, transform_indices = @transform_14, window_bounds = array<i64: 1, 128>}, {pipeline_mode = #tpu.pipeline_mode<synchronous>, transform_indices = @transform_15, window_bounds = array<i64: 128, 32>}, {pipeline_mode = #tpu.pipeline_mode<synchronous>, transform_indices = @transform_16, window_bounds = array<i64: 1, 32>}, {transform_indices = @transform_17, window_bounds = array<i64: 16, 32>}]} {
    %c0 = arith.constant 0 : index
    %c0_0 = arith.constant 0 : index
    %0 = vector.load %arg4[%c0, %c0_0] : memref<1x32xf32, #tpu.memory_space<vmem>>, vector<1x32xf32>
    %c0_1 = arith.constant 0 : index
    %c0_2 = arith.constant 0 : index
    %1 = vector.load %arg5[%c0_1, %c0_2] : memref<1x32xf32, #tpu.memory_space<vmem>>, vector<1x32xf32>
    %c0_3 = arith.constant 0 : index
    %c0_4 = arith.constant 0 : index
    %2 = vector.load %arg6[%c0_3, %c0_4] : memref<1x32xf32, #tpu.memory_space<vmem>>, vector<1x32xf32>
    %c0_5 = arith.constant 0 : index
    %c0_6 = arith.constant 0 : index
    %3 = vector.load %arg7[%c0_5, %c0_6] : memref<1x32xf32, #tpu.memory_space<vmem>>, vector<1x32xf32>
    %c0_7 = arith.constant 0 : index
    %c0_8 = arith.constant 0 : index
    %4 = vector.load %arg12[%c0_7, %c0_8] : memref<1x32xf32, #tpu.memory_space<vmem>>, vector<1x32xf32>
    %c0_9 = arith.constant 0 : index
    %c0_10 = arith.constant 0 : index
    %5 = vector.load %arg13[%c0_9, %c0_10] : memref<1x32xf32, #tpu.memory_space<vmem>>, vector<1x32xf32>
    %c0_11 = arith.constant 0 : index
    %c0_12 = arith.constant 0 : index
    %6 = vector.load %arg11[%c0_11, %c0_12] : memref<1x32xf32, #tpu.memory_space<vmem>>, vector<1x32xf32>
    %c0_13 = arith.constant 0 : index
    %c0_14 = arith.constant 0 : index
    %7 = vector.load %arg15[%c0_13, %c0_14] : memref<1x128xf32, #tpu.memory_space<vmem>>, vector<1x128xf32>
    %c0_15 = arith.constant 0 : index
    %c0_16 = arith.constant 0 : index
    %8 = vector.load %arg17[%c0_15, %c0_16] : memref<1x32xf32, #tpu.memory_space<vmem>>, vector<1x32xf32>
    %c0_17 = arith.constant 0 : index
    %c0_18 = arith.constant 0 : index
    %9 = vector.load %arg8[%c0_17, %c0_18] : memref<32x32xf32, #tpu.memory_space<vmem>>, vector<32x32xf32>
    %c0_19 = arith.constant 0 : index
    %c0_20 = arith.constant 0 : index
    %10 = vector.load %arg9[%c0_19, %c0_20] : memref<32x64xf32, #tpu.memory_space<vmem>>, vector<32x64xf32>
    %c0_21 = arith.constant 0 : index
    %c0_22 = arith.constant 0 : index
    %11 = vector.load %arg10[%c0_21, %c0_22] : memref<32x32xf32, #tpu.memory_space<vmem>>, vector<32x32xf32>
    %c0_23 = arith.constant 0 : index
    %c0_24 = arith.constant 0 : index
    %12 = vector.load %arg14[%c0_23, %c0_24] : memref<32x128xf32, #tpu.memory_space<vmem>>, vector<32x128xf32>
    %c0_25 = arith.constant 0 : index
    %c0_26 = arith.constant 0 : index
    %13 = vector.load %arg16[%c0_25, %c0_26] : memref<128x32xf32, #tpu.memory_space<vmem>>, vector<128x32xf32>
    %c0_27 = arith.constant 0 : index
    %c0_28 = arith.constant 0 : index
    %14 = vector.load %arg1[%c0_27, %c0_28] : memref<16x32xf32, #tpu.memory_space<vmem>>, vector<16x32xf32>
    %c0_29 = arith.constant 0 : index
    %c0_30 = arith.constant 0 : index
    %15 = vector.load %arg2[%c0_29, %c0_30] : memref<8x32xf32, #tpu.memory_space<vmem>>, vector<8x32xf32>
    %c0_31 = arith.constant 0 : index
    %c0_32 = arith.constant 0 : index
    %c0_33 = arith.constant 0 : index
    %16 = vector.load %arg3[%c0_31, %c0_32, %c0_33] : memref<1x1x8xf32, #tpu.memory_space<vmem>>, vector<1x1x8xf32>
    %cst = arith.constant dense<0.000000e+00> : vector<16xf32>
    %17 = vector.multi_reduction <add>, %14, %cst [1] : vector<16x32xf32> to vector<16xf32>
    %18 = vector.shape_cast %17 : vector<16xf32> to vector<16x1xf32>
    %cst_34 = arith.constant 3.200000e+01 : f32
    %19 = vector.broadcast %cst_34 : f32 to vector<16x1xf32>
    %20 = arith.divf %18, %19 : vector<16x1xf32>
    %21 = vector.broadcast %20 : vector<16x1xf32> to vector<16x32xf32>
    %22 = arith.subf %14, %21 : vector<16x32xf32>
    %23 = arith.mulf %22, %22 : vector<16x32xf32>
    %cst_35 = arith.constant dense<0.000000e+00> : vector<16xf32>
    %24 = vector.multi_reduction <add>, %23, %cst_35 [1] : vector<16x32xf32> to vector<16xf32>
    %25 = vector.shape_cast %24 : vector<16xf32> to vector<16x1xf32>
    %cst_36 = arith.constant 3.200000e+01 : f32
    %26 = vector.broadcast %cst_36 : f32 to vector<16x1xf32>
    %27 = arith.divf %25, %26 : vector<16x1xf32>
    %28 = vector.broadcast %20 : vector<16x1xf32> to vector<16x32xf32>
    %29 = arith.subf %14, %28 : vector<16x32xf32>
    %cst_37 = arith.constant 9.99999974E-6 : f32
    %30 = vector.broadcast %cst_37 : f32 to vector<16x1xf32>
    %31 = arith.addf %27, %30 : vector<16x1xf32>
    %32 = math.rsqrt %31 : vector<16x1xf32>
    %33 = vector.broadcast %32 : vector<16x1xf32> to vector<16x32xf32>
    %34 = arith.mulf %29, %33 : vector<16x32xf32>
    %35 = vector.broadcast %0 : vector<1x32xf32> to vector<16x32xf32>
    %36 = arith.mulf %34, %35 : vector<16x32xf32>
    %37 = vector.broadcast %1 : vector<1x32xf32> to vector<16x32xf32>
    %38 = arith.addf %36, %37 : vector<16x32xf32>
    %cst_38 = arith.constant dense<0.000000e+00> : vector<8xf32>
    %39 = vector.multi_reduction <add>, %15, %cst_38 [1] : vector<8x32xf32> to vector<8xf32>
    %40 = vector.shape_cast %39 : vector<8xf32> to vector<8x1xf32>
    %cst_39 = arith.constant 3.200000e+01 : f32
    %41 = vector.broadcast %cst_39 : f32 to vector<8x1xf32>
    %42 = arith.divf %40, %41 : vector<8x1xf32>
    %43 = vector.broadcast %42 : vector<8x1xf32> to vector<8x32xf32>
    %44 = arith.subf %15, %43 : vector<8x32xf32>
    %45 = arith.mulf %44, %44 : vector<8x32xf32>
    %cst_40 = arith.constant dense<0.000000e+00> : vector<8xf32>
    %46 = vector.multi_reduction <add>, %45, %cst_40 [1] : vector<8x32xf32> to vector<8xf32>
    %47 = vector.shape_cast %46 : vector<8xf32> to vector<8x1xf32>
    %cst_41 = arith.constant 3.200000e+01 : f32
    %48 = vector.broadcast %cst_41 : f32 to vector<8x1xf32>
    %49 = arith.divf %47, %48 : vector<8x1xf32>
    %50 = vector.broadcast %42 : vector<8x1xf32> to vector<8x32xf32>
    %51 = arith.subf %15, %50 : vector<8x32xf32>
    %cst_42 = arith.constant 9.99999974E-6 : f32
    %52 = vector.broadcast %cst_42 : f32 to vector<8x1xf32>
    %53 = arith.addf %49, %52 : vector<8x1xf32>
    %54 = math.rsqrt %53 : vector<8x1xf32>
    %55 = vector.broadcast %54 : vector<8x1xf32> to vector<8x32xf32>
    %56 = arith.mulf %51, %55 : vector<8x32xf32>
    %57 = vector.broadcast %2 : vector<1x32xf32> to vector<8x32xf32>
    %58 = arith.mulf %56, %57 : vector<8x32xf32>
    %59 = vector.broadcast %3 : vector<1x32xf32> to vector<8x32xf32>
    %60 = arith.addf %58, %59 : vector<8x32xf32>
    %cst_43 = arith.constant dense<0.000000e+00> : vector<16x32xf32>
    %61 = tpu.matmul %38, %9, %cst_43 {dimension_numbers = #tpu.dot_dimension_numbers<[1], [0], [0], [1], [0, 0, 1, 1], [], []>} : vector<16x32xf32>, vector<32x32xf32>, vector<16x32xf32> -> vector<16x32xf32>
    %cst_44 = arith.constant dense<0.000000e+00> : vector<8x64xf32>
    %62 = tpu.matmul %60, %10, %cst_44 {dimension_numbers = #tpu.dot_dimension_numbers<[1], [0], [0], [1], [0, 0, 1, 1], [], []>} : vector<8x32xf32>, vector<32x64xf32>, vector<8x64xf32> -> vector<8x64xf32>
    %63 = vector.extract_strided_slice %61 {offsets = [0, 0], sizes = [16, 8], strides = [1, 1]} : vector<16x32xf32> to vector<16x8xf32>
    %64 = vector.shape_cast %63 : vector<16x8xf32> to vector<1x16x8xf32>
    %65 = vector.extract_strided_slice %62 {offsets = [0, 0], sizes = [8, 8], strides = [1, 1]} : vector<8x64xf32> to vector<8x8xf32>
    %66 = vector.shape_cast %65 : vector<8x8xf32> to vector<1x8x8xf32>
    %67 = vector.extract_strided_slice %62 {offsets = [0, 32], sizes = [8, 8], strides = [1, 1]} : vector<8x64xf32> to vector<8x8xf32>
    %68 = vector.shape_cast %67 : vector<8x8xf32> to vector<1x8x8xf32>
    "tpu.trace_start"() <{level = 10 : i32, message = "bnd,bmd->bnm"}> : () -> ()
    %cst_45 = arith.constant dense<0.000000e+00> : vector<1x16x8xf32>
    %69 = tpu.matmul %64, %66, %cst_45 {dimension_numbers = #tpu.dot_dimension_numbers<[2], [2], [1], [1], [0, 0, 0, 1, 1, 1], [0], [0]>} : vector<1x16x8xf32>, vector<1x8x8xf32>, vector<1x16x8xf32> -> vector<1x16x8xf32>
    "tpu.trace_stop"() : () -> ()
    %70 = vector.broadcast %16 : vector<1x1x8xf32> to vector<1x16x8xf32>
    %71 = arith.addf %69, %70 : vector<1x16x8xf32>
    %cst_46 = arith.constant dense<0xFF800000> : vector<1x16xf32>
    %72 = vector.multi_reduction <maximumf>, %71, %cst_46 [2] : vector<1x16x8xf32> to vector<1x16xf32>
    %73 = vector.shape_cast %72 : vector<1x16xf32> to vector<1x16x1xf32>
    %74 = vector.broadcast %73 : vector<1x16x1xf32> to vector<1x16x8xf32>
    %75 = arith.subf %71, %74 : vector<1x16x8xf32>
    %76 = math.exp %75 : vector<1x16x8xf32>
    %cst_47 = arith.constant dense<0.000000e+00> : vector<1x16xf32>
    %77 = vector.multi_reduction <add>, %76, %cst_47 [2] : vector<1x16x8xf32> to vector<1x16xf32>
    %78 = vector.shape_cast %77 : vector<1x16xf32> to vector<1x16x1xf32>
    %79 = vector.broadcast %78 : vector<1x16x1xf32> to vector<1x16x8xf32>
    %80 = arith.divf %76, %79 : vector<1x16x8xf32>
    "tpu.trace_start"() <{level = 10 : i32, message = "bnm,bmd->bnd"}> : () -> ()
    %cst_48 = arith.constant dense<0.000000e+00> : vector<1x16x8xf32>
    %81 = tpu.matmul %80, %68, %cst_48 {dimension_numbers = #tpu.dot_dimension_numbers<[2], [1], [1], [2], [0, 0, 0, 1, 1, 2], [0], [0]>} : vector<1x16x8xf32>, vector<1x8x8xf32>, vector<1x16x8xf32> -> vector<1x16x8xf32>
    "tpu.trace_stop"() : () -> ()
    %82 = vector.shape_cast %81 : vector<1x16x8xf32> to vector<16x8xf32>
    %83 = vector.extract_strided_slice %61 {offsets = [0, 8], sizes = [16, 8], strides = [1, 1]} : vector<16x32xf32> to vector<16x8xf32>
    %84 = vector.shape_cast %83 : vector<16x8xf32> to vector<1x16x8xf32>
    %85 = vector.extract_strided_slice %62 {offsets = [0, 8], sizes = [8, 8], strides = [1, 1]} : vector<8x64xf32> to vector<8x8xf32>
    %86 = vector.shape_cast %85 : vector<8x8xf32> to vector<1x8x8xf32>
    %87 = vector.extract_strided_slice %62 {offsets = [0, 40], sizes = [8, 8], strides = [1, 1]} : vector<8x64xf32> to vector<8x8xf32>
    %88 = vector.shape_cast %87 : vector<8x8xf32> to vector<1x8x8xf32>
    "tpu.trace_start"() <{level = 10 : i32, message = "bnd,bmd->bnm"}> : () -> ()
    %cst_49 = arith.constant dense<0.000000e+00> : vector<1x16x8xf32>
    %89 = tpu.matmul %84, %86, %cst_49 {dimension_numbers = #tpu.dot_dimension_numbers<[2], [2], [1], [1], [0, 0, 0, 1, 1, 1], [0], [0]>} : vector<1x16x8xf32>, vector<1x8x8xf32>, vector<1x16x8xf32> -> vector<1x16x8xf32>
    "tpu.trace_stop"() : () -> ()
    %90 = vector.broadcast %16 : vector<1x1x8xf32> to vector<1x16x8xf32>
    %91 = arith.addf %89, %90 : vector<1x16x8xf32>
    %cst_50 = arith.constant dense<0xFF800000> : vector<1x16xf32>
    %92 = vector.multi_reduction <maximumf>, %91, %cst_50 [2] : vector<1x16x8xf32> to vector<1x16xf32>
    %93 = vector.shape_cast %92 : vector<1x16xf32> to vector<1x16x1xf32>
    %94 = vector.broadcast %93 : vector<1x16x1xf32> to vector<1x16x8xf32>
    %95 = arith.subf %91, %94 : vector<1x16x8xf32>
    %96 = math.exp %95 : vector<1x16x8xf32>
    %cst_51 = arith.constant dense<0.000000e+00> : vector<1x16xf32>
    %97 = vector.multi_reduction <add>, %96, %cst_51 [2] : vector<1x16x8xf32> to vector<1x16xf32>
    %98 = vector.shape_cast %97 : vector<1x16xf32> to vector<1x16x1xf32>
    %99 = vector.broadcast %98 : vector<1x16x1xf32> to vector<1x16x8xf32>
    %100 = arith.divf %96, %99 : vector<1x16x8xf32>
    "tpu.trace_start"() <{level = 10 : i32, message = "bnm,bmd->bnd"}> : () -> ()
    %cst_52 = arith.constant dense<0.000000e+00> : vector<1x16x8xf32>
    %101 = tpu.matmul %100, %88, %cst_52 {dimension_numbers = #tpu.dot_dimension_numbers<[2], [1], [1], [2], [0, 0, 0, 1, 1, 2], [0], [0]>} : vector<1x16x8xf32>, vector<1x8x8xf32>, vector<1x16x8xf32> -> vector<1x16x8xf32>
    "tpu.trace_stop"() : () -> ()
    %102 = vector.shape_cast %101 : vector<1x16x8xf32> to vector<16x8xf32>
    %103 = vector.extract_strided_slice %61 {offsets = [0, 16], sizes = [16, 8], strides = [1, 1]} : vector<16x32xf32> to vector<16x8xf32>
    %104 = vector.shape_cast %103 : vector<16x8xf32> to vector<1x16x8xf32>
    %105 = vector.extract_strided_slice %62 {offsets = [0, 16], sizes = [8, 8], strides = [1, 1]} : vector<8x64xf32> to vector<8x8xf32>
    %106 = vector.shape_cast %105 : vector<8x8xf32> to vector<1x8x8xf32>
    %107 = vector.extract_strided_slice %62 {offsets = [0, 48], sizes = [8, 8], strides = [1, 1]} : vector<8x64xf32> to vector<8x8xf32>
    %108 = vector.shape_cast %107 : vector<8x8xf32> to vector<1x8x8xf32>
    "tpu.trace_start"() <{level = 10 : i32, message = "bnd,bmd->bnm"}> : () -> ()
    %cst_53 = arith.constant dense<0.000000e+00> : vector<1x16x8xf32>
    %109 = tpu.matmul %104, %106, %cst_53 {dimension_numbers = #tpu.dot_dimension_numbers<[2], [2], [1], [1], [0, 0, 0, 1, 1, 1], [0], [0]>} : vector<1x16x8xf32>, vector<1x8x8xf32>, vector<1x16x8xf32> -> vector<1x16x8xf32>
    "tpu.trace_stop"() : () -> ()
    %110 = vector.broadcast %16 : vector<1x1x8xf32> to vector<1x16x8xf32>
    %111 = arith.addf %109, %110 : vector<1x16x8xf32>
    %cst_54 = arith.constant dense<0xFF800000> : vector<1x16xf32>
    %112 = vector.multi_reduction <maximumf>, %111, %cst_54 [2] : vector<1x16x8xf32> to vector<1x16xf32>
    %113 = vector.shape_cast %112 : vector<1x16xf32> to vector<1x16x1xf32>
    %114 = vector.broadcast %113 : vector<1x16x1xf32> to vector<1x16x8xf32>
    %115 = arith.subf %111, %114 : vector<1x16x8xf32>
    %116 = math.exp %115 : vector<1x16x8xf32>
    %cst_55 = arith.constant dense<0.000000e+00> : vector<1x16xf32>
    %117 = vector.multi_reduction <add>, %116, %cst_55 [2] : vector<1x16x8xf32> to vector<1x16xf32>
    %118 = vector.shape_cast %117 : vector<1x16xf32> to vector<1x16x1xf32>
    %119 = vector.broadcast %118 : vector<1x16x1xf32> to vector<1x16x8xf32>
    %120 = arith.divf %116, %119 : vector<1x16x8xf32>
    "tpu.trace_start"() <{level = 10 : i32, message = "bnm,bmd->bnd"}> : () -> ()
    %cst_56 = arith.constant dense<0.000000e+00> : vector<1x16x8xf32>
    %121 = tpu.matmul %120, %108, %cst_56 {dimension_numbers = #tpu.dot_dimension_numbers<[2], [1], [1], [2], [0, 0, 0, 1, 1, 2], [0], [0]>} : vector<1x16x8xf32>, vector<1x8x8xf32>, vector<1x16x8xf32> -> vector<1x16x8xf32>
    "tpu.trace_stop"() : () -> ()
    %122 = vector.shape_cast %121 : vector<1x16x8xf32> to vector<16x8xf32>
    %123 = vector.extract_strided_slice %61 {offsets = [0, 24], sizes = [16, 8], strides = [1, 1]} : vector<16x32xf32> to vector<16x8xf32>
    %124 = vector.shape_cast %123 : vector<16x8xf32> to vector<1x16x8xf32>
    %125 = vector.extract_strided_slice %62 {offsets = [0, 24], sizes = [8, 8], strides = [1, 1]} : vector<8x64xf32> to vector<8x8xf32>
    %126 = vector.shape_cast %125 : vector<8x8xf32> to vector<1x8x8xf32>
    %127 = vector.extract_strided_slice %62 {offsets = [0, 56], sizes = [8, 8], strides = [1, 1]} : vector<8x64xf32> to vector<8x8xf32>
    %128 = vector.shape_cast %127 : vector<8x8xf32> to vector<1x8x8xf32>
    "tpu.trace_start"() <{level = 10 : i32, message = "bnd,bmd->bnm"}> : () -> ()
    %cst_57 = arith.constant dense<0.000000e+00> : vector<1x16x8xf32>
    %129 = tpu.matmul %124, %126, %cst_57 {dimension_numbers = #tpu.dot_dimension_numbers<[2], [2], [1], [1], [0, 0, 0, 1, 1, 1], [0], [0]>} : vector<1x16x8xf32>, vector<1x8x8xf32>, vector<1x16x8xf32> -> vector<1x16x8xf32>
    "tpu.trace_stop"() : () -> ()
    %130 = vector.broadcast %16 : vector<1x1x8xf32> to vector<1x16x8xf32>
    %131 = arith.addf %129, %130 : vector<1x16x8xf32>
    %cst_58 = arith.constant dense<0xFF800000> : vector<1x16xf32>
    %132 = vector.multi_reduction <maximumf>, %131, %cst_58 [2] : vector<1x16x8xf32> to vector<1x16xf32>
    %133 = vector.shape_cast %132 : vector<1x16xf32> to vector<1x16x1xf32>
    %134 = vector.broadcast %133 : vector<1x16x1xf32> to vector<1x16x8xf32>
    %135 = arith.subf %131, %134 : vector<1x16x8xf32>
    %136 = math.exp %135 : vector<1x16x8xf32>
    %cst_59 = arith.constant dense<0.000000e+00> : vector<1x16xf32>
    %137 = vector.multi_reduction <add>, %136, %cst_59 [2] : vector<1x16x8xf32> to vector<1x16xf32>
    %138 = vector.shape_cast %137 : vector<1x16xf32> to vector<1x16x1xf32>
    %139 = vector.broadcast %138 : vector<1x16x1xf32> to vector<1x16x8xf32>
    %140 = arith.divf %136, %139 : vector<1x16x8xf32>
    "tpu.trace_start"() <{level = 10 : i32, message = "bnm,bmd->bnd"}> : () -> ()
    %cst_60 = arith.constant dense<0.000000e+00> : vector<1x16x8xf32>
    %141 = tpu.matmul %140, %128, %cst_60 {dimension_numbers = #tpu.dot_dimension_numbers<[2], [1], [1], [2], [0, 0, 0, 1, 1, 2], [0], [0]>} : vector<1x16x8xf32>, vector<1x8x8xf32>, vector<1x16x8xf32> -> vector<1x16x8xf32>
    "tpu.trace_stop"() : () -> ()
    %142 = vector.shape_cast %141 : vector<1x16x8xf32> to vector<16x8xf32>
    %143 = tpu.concatenate %82, %102, %122, %142 in 1 : vector<16x8xf32>, vector<16x8xf32>, vector<16x8xf32>, vector<16x8xf32> -> vector<16x32xf32>
    %cst_61 = arith.constant dense<0.000000e+00> : vector<16x32xf32>
    %144 = tpu.matmul %143, %11, %cst_61 {dimension_numbers = #tpu.dot_dimension_numbers<[1], [0], [0], [1], [0, 0, 1, 1], [], []>} : vector<16x32xf32>, vector<32x32xf32>, vector<16x32xf32> -> vector<16x32xf32>
    %145 = vector.broadcast %6 : vector<1x32xf32> to vector<16x32xf32>
    %146 = arith.addf %144, %145 : vector<16x32xf32>
    %147 = arith.addf %14, %146 : vector<16x32xf32>
    %cst_62 = arith.constant dense<0.000000e+00> : vector<16xf32>
    %148 = vector.multi_reduction <add>, %147, %cst_62 [1] : vector<16x32xf32> to vector<16xf32>
    %149 = vector.shape_cast %148 : vector<16xf32> to vector<16x1xf32>
    %cst_63 = arith.constant 3.200000e+01 : f32
    %150 = vector.broadcast %cst_63 : f32 to vector<16x1xf32>
    %151 = arith.divf %149, %150 : vector<16x1xf32>
    %152 = vector.broadcast %151 : vector<16x1xf32> to vector<16x32xf32>
    %153 = arith.subf %147, %152 : vector<16x32xf32>
    %154 = arith.mulf %153, %153 : vector<16x32xf32>
    %cst_64 = arith.constant dense<0.000000e+00> : vector<16xf32>
    %155 = vector.multi_reduction <add>, %154, %cst_64 [1] : vector<16x32xf32> to vector<16xf32>
    %156 = vector.shape_cast %155 : vector<16xf32> to vector<16x1xf32>
    %cst_65 = arith.constant 3.200000e+01 : f32
    %157 = vector.broadcast %cst_65 : f32 to vector<16x1xf32>
    %158 = arith.divf %156, %157 : vector<16x1xf32>
    %159 = vector.broadcast %151 : vector<16x1xf32> to vector<16x32xf32>
    %160 = arith.subf %147, %159 : vector<16x32xf32>
    %cst_66 = arith.constant 9.99999974E-6 : f32
    %161 = vector.broadcast %cst_66 : f32 to vector<16x1xf32>
    %162 = arith.addf %158, %161 : vector<16x1xf32>
    %163 = math.rsqrt %162 : vector<16x1xf32>
    %164 = vector.broadcast %163 : vector<16x1xf32> to vector<16x32xf32>
    %165 = arith.mulf %160, %164 : vector<16x32xf32>
    %166 = vector.broadcast %4 : vector<1x32xf32> to vector<16x32xf32>
    %167 = arith.mulf %165, %166 : vector<16x32xf32>
    %168 = vector.broadcast %5 : vector<1x32xf32> to vector<16x32xf32>
    %169 = arith.addf %167, %168 : vector<16x32xf32>
    %cst_67 = arith.constant dense<0.000000e+00> : vector<16x128xf32>
    %170 = tpu.matmul %169, %12, %cst_67 {dimension_numbers = #tpu.dot_dimension_numbers<[1], [0], [0], [1], [0, 0, 1, 1], [], []>} : vector<16x32xf32>, vector<32x128xf32>, vector<16x128xf32> -> vector<16x128xf32>
    %171 = vector.broadcast %7 : vector<1x128xf32> to vector<16x128xf32>
    %172 = arith.addf %170, %171 : vector<16x128xf32>
    %cst_68 = arith.constant 5.000000e-01 : f32
    %173 = vector.broadcast %cst_68 : f32 to vector<16x128xf32>
    %174 = arith.mulf %173, %172 : vector<16x128xf32>
    %cst_69 = arith.constant 2.000000e+00 : f32
    %175 = math.sqrt %cst_69 : f32
    %cst_70 = arith.constant 1.000000e+00 : f32
    %176 = arith.divf %cst_70, %175 : f32
    %177 = vector.broadcast %176 : f32 to vector<16x128xf32>
    %178 = arith.mulf %172, %177 : vector<16x128xf32>
    %179 = math.erf %178 : vector<16x128xf32>
    %cst_71 = arith.constant 1.000000e+00 : f32
    %180 = vector.broadcast %cst_71 : f32 to vector<16x128xf32>
    %181 = arith.addf %180, %179 : vector<16x128xf32>
    %182 = arith.mulf %174, %181 : vector<16x128xf32>
    %cst_72 = arith.constant dense<0.000000e+00> : vector<16x32xf32>
    %183 = tpu.matmul %182, %13, %cst_72 {dimension_numbers = #tpu.dot_dimension_numbers<[1], [0], [0], [1], [0, 0, 1, 1], [], []>} : vector<16x128xf32>, vector<128x32xf32>, vector<16x32xf32> -> vector<16x32xf32>
    %184 = vector.broadcast %8 : vector<1x32xf32> to vector<16x32xf32>
    %185 = arith.addf %183, %184 : vector<16x32xf32>
    %186 = arith.addf %147, %185 : vector<16x32xf32>
    %c0_73 = arith.constant 0 : index
    %c0_74 = arith.constant 0 : index
    %187 = vector.load %arg18[%c0_73, %c0_74] : memref<16x32xf32, #tpu.memory_space<vmem>>, vector<16x32xf32>
    tpu.vector_store %arg18[%c0_73, %c0_74], %186 {strides = array<i32>} : memref<16x32xf32, #tpu.memory_space<vmem>>, vector<16x32xf32>,
    return
  }
  func.func @transform_0(%arg0: i32) -> (i32, i32) {
    %c0_i32 = arith.constant 0 : i32
    %c0_i32_0 = arith.constant 0 : i32
    return %arg0, %c0_i32 : i32, i32
  }
  func.func @transform_1(%arg0: i32) -> (i32, i32) {
    %c0_i32 = arith.constant 0 : i32
    %c0_i32_0 = arith.constant 0 : i32
    return %arg0, %c0_i32 : i32, i32
  }
  func.func @transform_2(%arg0: i32) -> (i32, i32, i32) {
    %c0_i32 = arith.constant 0 : i32
    %c0_i32_0 = arith.constant 0 : i32
    %c0_i32_1 = arith.constant 0 : i32
    return %arg0, %c0_i32, %c0_i32_0 : i32, i32, i32
  }
  func.func @transform_3(%arg0: i32) -> (i32, i32) {
    %c0_i32 = arith.constant 0 : i32
    %c0_i32_0 = arith.constant 0 : i32
    %c0_i32_1 = arith.constant 0 : i32
    return %c0_i32, %c0_i32_0 : i32, i32
  }
  func.func @transform_4(%arg0: i32) -> (i32, i32) {
    %c0_i32 = arith.constant 0 : i32
    %c0_i32_0 = arith.constant 0 : i32
    %c0_i32_1 = arith.constant 0 : i32
    return %c0_i32, %c0_i32_0 : i32, i32
  }
  func.func @transform_5(%arg0: i32) -> (i32, i32) {
    %c0_i32 = arith.constant 0 : i32
    %c0_i32_0 = arith.constant 0 : i32
    %c0_i32_1 = arith.constant 0 : i32
    return %c0_i32, %c0_i32_0 : i32, i32
  }
  func.func @transform_6(%arg0: i32) -> (i32, i32) {
    %c0_i32 = arith.constant 0 : i32
    %c0_i32_0 = arith.constant 0 : i32
    %c0_i32_1 = arith.constant 0 : i32
    return %c0_i32, %c0_i32_0 : i32, i32
  }
  func.func @transform_7(%arg0: i32) -> (i32, i32) {
    %c0_i32 = arith.constant 0 : i32
    %c0_i32_0 = arith.constant 0 : i32
    %c0_i32_1 = arith.constant 0 : i32
    return %c0_i32, %c0_i32_0 : i32, i32
  }
  func.func @transform_8(%arg0: i32) -> (i32, i32) {
    %c0_i32 = arith.constant 0 : i32
    %c0_i32_0 = arith.constant 0 : i32
    %c0_i32_1 = arith.constant 0 : i32
    return %c0_i32, %c0_i32_0 : i32, i32
  }
  func.func @transform_9(%arg0: i32) -> (i32, i32) {
    %c0_i32 = arith.constant 0 : i32
    %c0_i32_0 = arith.constant 0 : i32
    %c0_i32_1 = arith.constant 0 : i32
    return %c0_i32, %c0_i32_0 : i32, i32
  }
  func.func @transform_10(%arg0: i32) -> (i32, i32) {
    %c0_i32 = arith.constant 0 : i32
    %c0_i32_0 = arith.constant 0 : i32
    %c0_i32_1 = arith.constant 0 : i32
    return %c0_i32, %c0_i32_0 : i32, i32
  }
  func.func @transform_11(%arg0: i32) -> (i32, i32) {
    %c0_i32 = arith.constant 0 : i32
    %c0_i32_0 = arith.constant 0 : i32
    %c0_i32_1 = arith.constant 0 : i32
    return %c0_i32, %c0_i32_0 : i32, i32
  }
  func.func @transform_12(%arg0: i32) -> (i32, i32) {
    %c0_i32 = arith.constant 0 : i32
    %c0_i32_0 = arith.constant 0 : i32
    %c0_i32_1 = arith.constant 0 : i32
    return %c0_i32, %c0_i32_0 : i32, i32
  }
  func.func @transform_13(%arg0: i32) -> (i32, i32) {
    %c0_i32 = arith.constant 0 : i32
    %c0_i32_0 = arith.constant 0 : i32
    %c0_i32_1 = arith.constant 0 : i32
    return %c0_i32, %c0_i32_0 : i32, i32
  }
  func.func @transform_14(%arg0: i32) -> (i32, i32) {
    %c0_i32 = arith.constant 0 : i32
    %c0_i32_0 = arith.constant 0 : i32
    %c0_i32_1 = arith.constant 0 : i32
    return %c0_i32, %c0_i32_0 : i32, i32
  }
  func.func @transform_15(%arg0: i32) -> (i32, i32) {
    %c0_i32 = arith.constant 0 : i32
    %c0_i32_0 = arith.constant 0 : i32
    %c0_i32_1 = arith.constant 0 : i32
    return %c0_i32, %c0_i32_0 : i32, i32
  }
  func.func @transform_16(%arg0: i32) -> (i32, i32) {
    %c0_i32 = arith.constant 0 : i32
    %c0_i32_0 = arith.constant 0 : i32
    %c0_i32_1 = arith.constant 0 : i32
    return %c0_i32, %c0_i32_0 : i32, i32
  }
  func.func @transform_17(%arg0: i32) -> (i32, i32) {
    %c0_i32 = arith.constant 0 : i32
    %c0_i32_0 = arith.constant 0 : i32
    return %arg0, %c0_i32 : i32, i32
  }
}

</mosaic_0001>

<llo_original>
// kernel: tpu_custom_call.1
$region0: #{tpu_custom_call.1}
  #allocation0 [shape = 'u32[]', space=smem, size = 0x4, offset = 0x4, fixed_abs, tag = 'smem constant byte address 0x4 - core index']
  #allocation1 [shape = 'u32[144,128]{1,0:T(1,128)}', space=vmem, size = 0x12000, scoped, tag = 'internal scratch']
  %s0 = inlined_call_operand.vmem [shape: f32[32,32], index: 0, kind: input, shape index: {}]
  %s1 = inlined_call_operand.hbm [shape: f32[16,32], index: 1, kind: input, shape index: {}]
  %s2 = inlined_call_operand.vmem [shape: f32[2,1,8], index: 2, kind: input, shape index: {}]
  %s3 = inlined_call_operand.vmem [shape: f32[1,32], index: 3, kind: input, shape index: {}]
  %s4 = inlined_call_operand.vmem [shape: f32[1,32], index: 4, kind: input, shape index: {}]
  %s5 = inlined_call_operand.vmem [shape: f32[1,32], index: 5, kind: input, shape index: {}]
  %s6 = inlined_call_operand.vmem [shape: f32[1,32], index: 6, kind: input, shape index: {}]
  %s7 = inlined_call_operand.vmem [shape: f32[32,32], index: 7, kind: input, shape index: {}]
  %s8 = inlined_call_operand.vmem [shape: f32[32,64], index: 8, kind: input, shape index: {}]
  %s9 = inlined_call_operand.vmem [shape: f32[32,32], index: 9, kind: input, shape index: {}]
  %s10 = inlined_call_operand.vmem [shape: f32[1,32], index: 10, kind: input, shape index: {}]
  %s11 = inlined_call_operand.vmem [shape: f32[1,32], index: 11, kind: input, shape index: {}]
  %s12 = inlined_call_operand.vmem [shape: f32[1,32], index: 12, kind: input, shape index: {}]
  %s13 = inlined_call_operand.vmem [shape: f32[32,128], index: 13, kind: input, shape index: {}]
  %s14 = inlined_call_operand.vmem [shape: f32[1,128], index: 14, kind: input, shape index: {}]
  %s15 = inlined_call_operand.vmem [shape: f32[128,32], index: 15, kind: input, shape index: {}]
  %s16 = inlined_call_operand.vmem [shape: f32[1,32], index: 16, kind: input, shape index: {}]
  %s17 = inlined_call_operand.hbm [shape: f32[32,32], index: 17, kind: output, shape index: {}]
  %s18 = sld [smem:[#allocation0]]
  $region105: #{tpu_custom_call.1} parent=0
    _
  %s20 = ssub.s32 1, %s18
  %s21 = scalar_select 0, %s20, %s18
  $region1: #{tpu_custom_call.1} parent=0
    #allocation2 [shape = 'u8[8192]{0}', space=vmem, size = 0x2000, scoped, tag = 'input window, operand 1']
    #allocation3 [shape = 's32[2]{0}', space=sflag, size = 0x8, scoped, tag = 'scoped memory for tpu_custom_call.1']
    #allocation4 [shape = 's32[2]{0}', space=sflag, size = 0x8, scoped, tag = 'scoped memory for tpu_custom_call.1']
    #allocation5 [shape = 'u8[16384]{0}', space=vmem, size = 0x4000, scoped, tag = 'output window, operand 0']
    %22 = vsyncpa [#allocation3], 0
    %s23 = scalar_lea.sflag [#allocation3], 1
    %24 = vsyncpa %s23, 0
    %25 = vsyncpa [#allocation4], 0
    %s26 = scalar_lea.sflag [#allocation4], 1
    %27 = vsyncpa %s26, 0
    loop: start=0, step=1, limit=4
    $region2: #{tpu_custom_call.1} parent=1 // loop_pre_header
      _
    $region3: #{tpu_custom_call.1} parent=1 // loop_header
      %s29 = sphi 0, %s33
      %p30 = scmp.ge.s32.totalorder %s29, 4
      %s39 = sphi 0, %s41
      %s42 = sphi 0, %s39
      %s43 = sphi 0, %s42
      %s59 = sphi 0, %s43
      %s65 = sphi 0, %s67
      %s68 = sphi 0, %s65
      %s69 = sphi 0, %s68
      %s85 = sphi 0, %s69
      %s91 = sphi 0, %s93
      %s94 = sphi 0, %s91
      %s95 = sphi 0, %s94
      %s111 = sphi 0, %s95
      %s115 = sphi 0, %s115
      %s117 = sphi 0, %s115
      %s118 = sphi 0, %s117
      %s132 = sphi 0, %s118
      %s136 = sphi 0, %s136
      %s138 = sphi 0, %s136
      %s139 = sphi 0, %s138
      %s153 = sphi 0, %s139
      %s157 = sphi 0, %s157
      %s159 = sphi 0, %s157
      %s160 = sphi 0, %s159
      %s174 = sphi 0, %s160
      %s178 = sphi 0, %s178
      %s180 = sphi 0, %s178
      %s181 = sphi 0, %s180
      %s195 = sphi 0, %s181
      %s199 = sphi 0, %s199
      %s201 = sphi 0, %s199
      %s202 = sphi 0, %s201
      %s216 = sphi 0, %s202
      %s220 = sphi 0, %s220
      %s222 = sphi 0, %s220
      %s223 = sphi 0, %s222
      %s237 = sphi 0, %s223
      %s241 = sphi 0, %s241
      %s243 = sphi 0, %s241
      %s244 = sphi 0, %s243
      %s258 = sphi 0, %s244
      %s262 = sphi 0, %s262
      %s264 = sphi 0, %s262
      %s265 = sphi 0, %s264
      %s279 = sphi 0, %s265
      %s283 = sphi 0, %s283
      %s285 = sphi 0, %s283
      %s286 = sphi 0, %s285
      %s300 = sphi 0, %s286
      %s304 = sphi 0, %s304
      %s306 = sphi 0, %s304
      %s307 = sphi 0, %s306
      %s321 = sphi 0, %s307
      %s325 = sphi 0, %s325
      %s327 = sphi 0, %s325
      %s328 = sphi 0, %s327
      %s342 = sphi 0, %s328
      %s346 = sphi 0, %s346
      %s348 = sphi 0, %s346
      %s349 = sphi 0, %s348
      %s363 = sphi 0, %s349
      %s367 = sphi 0, %s367
      %s369 = sphi 0, %s367
      %s370 = sphi 0, %s369
      %s384 = sphi 0, %s370
      %s388 = sphi 0, %s388
      %s390 = sphi 0, %s388
      %s391 = sphi 0, %s390
      %s405 = sphi 0, %s391
      %s411 = sphi 0, %s413
      %s414 = sphi 0, %s411
      %s415 = sphi 0, %s414
      %s431 = sphi 0, %s415
    $region4: #{tpu_custom_call.1} parent=1 // loop_header_branch
      %32 = sbr.rel (%p30) target = $region8
    $region5: #{tpu_custom_call.1} parent=1 // loop_body
      %s34 = ssub.s32 %s29, 1
      %s35 = ssub.s32 %s29, 2
      %s36 = sadd.s32 %s29, 1
      %s37 = ssub.s32 %s29, %s36
      %p38 = scmp.eq.s32.totalorder %s37, 0
      %s40 = sadd.s32 %s39, 1
      %s41 = scalar_select %p38, %s39, %s40
      %p44 = pneg %p38
      %p45 = scmp.eq.s32.totalorder %s29, 1
      %p46 = por %p44, %p45
      %p47 = scmp.ne.s32.totalorder %s39, %s42
      %p48 = scmp.eq.s32.totalorder %s29, 0
      %p49 = por %p47, %p48
      %p50 = scmp.ne.s32.totalorder %s39, %s42
      %p51 = scmp.eq.s32.totalorder %s34, 1
      %p52 = por %p50, %p51
      %p53 = scmp.ne.s32.totalorder %s42, %s43
      %p54 = scmp.eq.s32.totalorder %s34, 0
      %p55 = por %p53, %p54
      %p56 = scmp.ne.s32.totalorder %s42, %s43
      %p57 = scmp.eq.s32.totalorder %s35, 1
      %p58 = por %p56, %p57
      %p60 = scmp.ne.s32.totalorder %s43, %s59
      %p61 = scmp.eq.s32.totalorder %s35, 0
      %p62 = por %p60, %p61
      %s63 = ssub.s32 %s29, %s36
      %p64 = scmp.eq.s32.totalorder %s63, 0
      %s66 = sadd.s32 %s65, 1
      %s67 = scalar_select %p64, %s65, %s66
      %p70 = pneg %p64
      %p71 = scmp.eq.s32.totalorder %s29, 1
      %p72 = por %p70, %p71
      %p73 = scmp.ne.s32.totalorder %s65, %s68
      %p74 = scmp.eq.s32.totalorder %s29, 0
      %p75 = por %p73, %p74
      %p76 = scmp.ne.s32.totalorder %s65, %s68
      %p77 = scmp.eq.s32.totalorder %s34, 1
      %p78 = por %p76, %p77
      %p79 = scmp.ne.s32.totalorder %s68, %s69
      %p80 = scmp.eq.s32.totalorder %s34, 0
      %p81 = por %p79, %p80
      %p82 = scmp.ne.s32.totalorder %s68, %s69
      %p83 = scmp.eq.s32.totalorder %s35, 1
      %p84 = por %p82, %p83
      %p86 = scmp.ne.s32.totalorder %s69, %s85
      %p87 = scmp.eq.s32.totalorder %s35, 0
      %p88 = por %p86, %p87
      %s89 = ssub.s32 %s29, %s36
      %p90 = scmp.eq.s32.totalorder %s89, 0
      %s92 = sadd.s32 %s91, 1
      %s93 = scalar_select %p90, %s91, %s92
      %p96 = pneg %p90
      %p97 = scmp.eq.s32.totalorder %s29, 1
      %p98 = por %p96, %p97
      %p99 = scmp.ne.s32.totalorder %s91, %s94
      %p100 = scmp.eq.s32.totalorder %s29, 0
      %p101 = por %p99, %p100
      %p102 = scmp.ne.s32.totalorder %s91, %s94
      %p103 = scmp.eq.s32.totalorder %s34, 1
      %p104 = por %p102, %p103
      %p105 = scmp.ne.s32.totalorder %s94, %s95
      %p106 = scmp.eq.s32.totalorder %s34, 0
      %p107 = por %p105, %p106
      %p108 = scmp.ne.s32.totalorder %s94, %s95
      %p109 = scmp.eq.s32.totalorder %s35, 1
      %p110 = por %p108, %p109
      %p112 = scmp.ne.s32.totalorder %s95, %s111
      %p113 = scmp.eq.s32.totalorder %s35, 0
      %p114 = por %p112, %p113
      %s116 = sadd.s32 %s115, 1
      %p119 = scmp.eq.s32.totalorder %s29, 1
      %p120 = scmp.ne.s32.totalorder %s115, %s117
      %p121 = scmp.eq.s32.totalorder %s29, 0
      %p122 = por %p120, %p121
      %p123 = scmp.ne.s32.totalorder %s115, %s117
      %p124 = scmp.eq.s32.totalorder %s34, 1
      %p125 = por %p123, %p124
      %p126 = scmp.ne.s32.totalorder %s117, %s118
      %p127 = scmp.eq.s32.totalorder %s34, 0
      %p128 = por %p126, %p127
      %p129 = scmp.ne.s32.totalorder %s117, %s118
      %p130 = scmp.eq.s32.totalorder %s35, 1
      %p131 = por %p129, %p130
      %p133 = scmp.ne.s32.totalorder %s118, %s132
      %p134 = scmp.eq.s32.totalorder %s35, 0
      %p135 = por %p133, %p134
      %s137 = sadd.s32 %s136, 1
      %p140 = scmp.eq.s32.totalorder %s29, 1
      %p141 = scmp.ne.s32.totalorder %s136, %s138
      %p142 = scmp.eq.s32.totalorder %s29, 0
      %p143 = por %p141, %p142
      %p144 = scmp.ne.s32.totalorder %s136, %s138
      %p145 = scmp.eq.s32.totalorder %s34, 1
      %p146 = por %p144, %p145
      %p147 = scmp.ne.s32.totalorder %s138, %s139
      %p148 = scmp.eq.s32.totalorder %s34, 0
      %p149 = por %p147, %p148
      %p150 = scmp.ne.s32.totalorder %s138, %s139
      %p151 = scmp.eq.s32.totalorder %s35, 1
      %p152 = por %p150, %p151
      %p154 = scmp.ne.s32.totalorder %s139, %s153
      %p155 = scmp.eq.s32.totalorder %s35, 0
      %p156 = por %p154, %p155
      %s158 = sadd.s32 %s157, 1
      %p161 = scmp.eq.s32.totalorder %s29, 1
      %p162 = scmp.ne.s32.totalorder %s157, %s159
      %p163 = scmp.eq.s32.totalorder %s29, 0
      %p164 = por %p162, %p163
      %p165 = scmp.ne.s32.totalorder %s157, %s159
      %p166 = scmp.eq.s32.totalorder %s34, 1
      %p167 = por %p165, %p166
      %p168 = scmp.ne.s32.totalorder %s159, %s160
      %p169 = scmp.eq.s32.totalorder %s34, 0
      %p170 = por %p168, %p169
      %p171 = scmp.ne.s32.totalorder %s159, %s160
      %p172 = scmp.eq.s32.totalorder %s35, 1
      %p173 = por %p171, %p172
      %p175 = scmp.ne.s32.totalorder %s160, %s174
      %p176 = scmp.eq.s32.totalorder %s35, 0
      %p177 = por %p175, %p176
      %s179 = sadd.s32 %s178, 1
      %p182 = scmp.eq.s32.totalorder %s29, 1
      %p183 = scmp.ne.s32.totalorder %s178, %s180
      %p184 = scmp.eq.s32.totalorder %s29, 0
      %p185 = por %p183, %p184
      %p186 = scmp.ne.s32.totalorder %s178, %s180
      %p187 = scmp.eq.s32.totalorder %s34, 1
      %p188 = por %p186, %p187
      %p189 = scmp.ne.s32.totalorder %s180, %s181
      %p190 = scmp.eq.s32.totalorder %s34, 0
      %p191 = por %p189, %p190
      %p192 = scmp.ne.s32.totalorder %s180, %s181
      %p193 = scmp.eq.s32.totalorder %s35, 1
      %p194 = por %p192, %p193
      %p196 = scmp.ne.s32.totalorder %s181, %s195
      %p197 = scmp.eq.s32.totalorder %s35, 0
      %p198 = por %p196, %p197
      %s200 = sadd.s32 %s199, 1
      %p203 = scmp.eq.s32.totalorder %s29, 1
      %p204 = scmp.ne.s32.totalorder %s199, %s201
      %p205 = scmp.eq.s32.totalorder %s29, 0
      %p206 = por %p204, %p205
      %p207 = scmp.ne.s32.totalorder %s199, %s201
      %p208 = scmp.eq.s32.totalorder %s34, 1
      %p209 = por %p207, %p208
      %p210 = scmp.ne.s32.totalorder %s201, %s202
      %p211 = scmp.eq.s32.totalorder %s34, 0
      %p212 = por %p210, %p211
      %p213 = scmp.ne.s32.totalorder %s201, %s202
      %p214 = scmp.eq.s32.totalorder %s35, 1
      %p215 = por %p213, %p214
      %p217 = scmp.ne.s32.totalorder %s202, %s216
      %p218 = scmp.eq.s32.totalorder %s35, 0
      %p219 = por %p217, %p218
      %s221 = sadd.s32 %s220, 1
      %p224 = scmp.eq.s32.totalorder %s29, 1
      %p225 = scmp.ne.s32.totalorder %s220, %s222
      %p226 = scmp.eq.s32.totalorder %s29, 0
      %p227 = por %p225, %p226
      %p228 = scmp.ne.s32.totalorder %s220, %s222
      %p229 = scmp.eq.s32.totalorder %s34, 1
      %p230 = por %p228, %p229
      %p231 = scmp.ne.s32.totalorder %s222, %s223
      %p232 = scmp.eq.s32.totalorder %s34, 0
      %p233 = por %p231, %p232
      %p234 = scmp.ne.s32.totalorder %s222, %s223
      %p235 = scmp.eq.s32.totalorder %s35, 1
      %p236 = por %p234, %p235
      %p238 = scmp.ne.s32.totalorder %s223, %s237
      %p239 = scmp.eq.s32.totalorder %s35, 0
      %p240 = por %p238, %p239
      %s242 = sadd.s32 %s241, 1
      %p245 = scmp.eq.s32.totalorder %s29, 1
      %p246 = scmp.ne.s32.totalorder %s241, %s243
      %p247 = scmp.eq.s32.totalorder %s29, 0
      %p248 = por %p246, %p247
      %p249 = scmp.ne.s32.totalorder %s241, %s243
      %p250 = scmp.eq.s32.totalorder %s34, 1
      %p251 = por %p249, %p250
      %p252 = scmp.ne.s32.totalorder %s243, %s244
      %p253 = scmp.eq.s32.totalorder %s34, 0
      %p254 = por %p252, %p253
      %p255 = scmp.ne.s32.totalorder %s243, %s244
      %p256 = scmp.eq.s32.totalorder %s35, 1
      %p257 = por %p255, %p256
      %p259 = scmp.ne.s32.totalorder %s244, %s258
      %p260 = scmp.eq.s32.totalorder %s35, 0
      %p261 = por %p259, %p260
      %s263 = sadd.s32 %s262, 1
      %p266 = scmp.eq.s32.totalorder %s29, 1
      %p267 = scmp.ne.s32.totalorder %s262, %s264
      %p268 = scmp.eq.s32.totalorder %s29, 0
      %p269 = por %p267, %p268
      %p270 = scmp.ne.s32.totalorder %s262, %s264
      %p271 = scmp.eq.s32.totalorder %s34, 1
      %p272 = por %p270, %p271
      %p273 = scmp.ne.s32.totalorder %s264, %s265
      %p274 = scmp.eq.s32.totalorder %s34, 0
      %p275 = por %p273, %p274
      %p276 = scmp.ne.s32.totalorder %s264, %s265
      %p277 = scmp.eq.s32.totalorder %s35, 1
      %p278 = por %p276, %p277
      %p280 = scmp.ne.s32.totalorder %s265, %s279
      %p281 = scmp.eq.s32.totalorder %s35, 0
      %p282 = por %p280, %p281
      %s284 = sadd.s32 %s283, 1
      %p287 = scmp.eq.s32.totalorder %s29, 1
      %p288 = scmp.ne.s32.totalorder %s283, %s285
      %p289 = scmp.eq.s32.totalorder %s29, 0
      %p290 = por %p288, %p289
      %p291 = scmp.ne.s32.totalorder %s283, %s285
      %p292 = scmp.eq.s32.totalorder %s34, 1
      %p293 = por %p291, %p292
      %p294 = scmp.ne.s32.totalorder %s285, %s286
      %p295 = scmp.eq.s32.totalorder %s34, 0
      %p296 = por %p294, %p295
      %p297 = scmp.ne.s32.totalorder %s285, %s286
      %p298 = scmp.eq.s32.totalorder %s35, 1
      %p299 = por %p297, %p298
      %p301 = scmp.ne.s32.totalorder %s286, %s300
      %p302 = scmp.eq.s32.totalorder %s35, 0
      %p303 = por %p301, %p302
      %s305 = sadd.s32 %s304, 1
      %p308 = scmp.eq.s32.totalorder %s29, 1
      %p309 = scmp.ne.s32.totalorder %s304, %s306
      %p310 = scmp.eq.s32.totalorder %s29, 0
      %p311 = por %p309, %p310
      %p312 = scmp.ne.s32.totalorder %s304, %s306
      %p313 = scmp.eq.s32.totalorder %s34, 1
      %p314 = por %p312, %p313
      %p315 = scmp.ne.s32.totalorder %s306, %s307
      %p316 = scmp.eq.s32.totalorder %s34, 0
      %p317 = por %p315, %p316
      %p318 = scmp.ne.s32.totalorder %s306, %s307
      %p319 = scmp.eq.s32.totalorder %s35, 1
      %p320 = por %p318, %p319
      %p322 = scmp.ne.s32.totalorder %s307, %s321
      %p323 = scmp.eq.s32.totalorder %s35, 0
      %p324 = por %p322, %p323
      %s326 = sadd.s32 %s325, 1
      %p329 = scmp.eq.s32.totalorder %s29, 1
      %p330 = scmp.ne.s32.totalorder %s325, %s327
      %p331 = scmp.eq.s32.totalorder %s29, 0
      %p332 = por %p330, %p331
      %p333 = scmp.ne.s32.totalorder %s325, %s327
      %p334 = scmp.eq.s32.totalorder %s34, 1
      %p335 = por %p333, %p334
      %p336 = scmp.ne.s32.totalorder %s327, %s328
      %p337 = scmp.eq.s32.totalorder %s34, 0
      %p338 = por %p336, %p337
      %p339 = scmp.ne.s32.totalorder %s327, %s328
      %p340 = scmp.eq.s32.totalorder %s35, 1
      %p341 = por %p339, %p340
      %p343 = scmp.ne.s32.totalorder %s328, %s342
      %p344 = scmp.eq.s32.totalorder %s35, 0
      %p345 = por %p343, %p344
      %s347 = sadd.s32 %s346, 1
      %p350 = scmp.eq.s32.totalorder %s29, 1
      %p351 = scmp.ne.s32.totalorder %s346, %s348
      %p352 = scmp.eq.s32.totalorder %s29, 0
      %p353 = por %p351, %p352
      %p354 = scmp.ne.s32.totalorder %s346, %s348
      %p355 = scmp.eq.s32.totalorder %s34, 1
      %p356 = por %p354, %p355
      %p357 = scmp.ne.s32.totalorder %s348, %s349
      %p358 = scmp.eq.s32.totalorder %s34, 0
      %p359 = por %p357, %p358
      %p360 = scmp.ne.s32.totalorder %s348, %s349
      %p361 = scmp.eq.s32.totalorder %s35, 1
      %p362 = por %p360, %p361
      %p364 = scmp.ne.s32.totalorder %s349, %s363
      %p365 = scmp.eq.s32.totalorder %s35, 0
      %p366 = por %p364, %p365
      %s368 = sadd.s32 %s367, 1
      %p371 = scmp.eq.s32.totalorder %s29, 1
      %p372 = scmp.ne.s32.totalorder %s367, %s369
      %p373 = scmp.eq.s32.totalorder %s29, 0
      %p374 = por %p372, %p373
      %p375 = scmp.ne.s32.totalorder %s367, %s369
      %p376 = scmp.eq.s32.totalorder %s34, 1
      %p377 = por %p375, %p376
      %p378 = scmp.ne.s32.totalorder %s369, %s370
      %p379 = scmp.eq.s32.totalorder %s34, 0
      %p380 = por %p378, %p379
      %p381 = scmp.ne.s32.totalorder %s369, %s370
      %p382 = scmp.eq.s32.totalorder %s35, 1
      %p383 = por %p381, %p382
      %p385 = scmp.ne.s32.totalorder %s370, %s384
      %p386 = scmp.eq.s32.totalorder %s35, 0
      %p387 = por %p385, %p386
      %s389 = sadd.s32 %s388, 1
      %p392 = scmp.eq.s32.totalorder %s29, 1
      %p393 = scmp.ne.s32.totalorder %s388, %s390
      %p394 = scmp.eq.s32.totalorder %s29, 0
      %p395 = por %p393, %p394
      %p396 = scmp.ne.s32.totalorder %s388, %s390
      %p397 = scmp.eq.s32.totalorder %s34, 1
      %p398 = por %p396, %p397
      %p399 = scmp.ne.s32.totalorder %s390, %s391
      %p400 = scmp.eq.s32.totalorder %s34, 0
      %p401 = por %p399, %p400
      %p402 = scmp.ne.s32.totalorder %s390, %s391
      %p403 = scmp.eq.s32.totalorder %s35, 1
      %p404 = por %p402, %p403
      %p406 = scmp.ne.s32.totalorder %s391, %s405
      %p407 = scmp.eq.s32.totalorder %s35, 0
      %p408 = por %p406, %p407
      %s409 = ssub.s32 %s29, %s36
      %p410 = scmp.eq.s32.totalorder %s409, 0
      %s412 = sadd.s32 %s411, 1
      %s413 = scalar_select %p410, %s411, %s412
      %p416 = pneg %p410
      %p417 = scmp.eq.s32.totalorder %s29, 1
      %p418 = por %p416, %p417
      %p419 = scmp.ne.s32.totalorder %s411, %s414
      %p420 = scmp.eq.s32.totalorder %s29, 0
      %p421 = por %p419, %p420
      %p422 = scmp.ne.s32.totalorder %s411, %s414
      %p423 = scmp.eq.s32.totalorder %s34, 1
      %p424 = por %p422, %p423
      %p425 = scmp.ne.s32.totalorder %s414, %s415
      %p426 = scmp.eq.s32.totalorder %s34, 0
      %p427 = por %p425, %p426
      %p428 = scmp.ne.s32.totalorder %s414, %s415
      %p429 = scmp.eq.s32.totalorder %s35, 1
      %p430 = por %p428, %p429
      %p432 = scmp.ne.s32.totalorder %s415, %s431
      %p433 = scmp.eq.s32.totalorder %s35, 0
      %p434 = por %p432, %p433
      %p435 = scmp.le.s32.totalorder 1, %s29
      %p436 = scmp.lt.s32.totalorder %s29, 3
      %p437 = pnand %p435, %p436
      %p438 = pneg %p437
      // Predicated region
      $region9: #{tpu_custom_call.1} parent=5 // pred_check
        _
      $region10: #{tpu_custom_call.1} parent=5 // pred_check_branch
        %440 = sbr.rel (%p437) target = $region12
      $region11: #{tpu_custom_call.1} parent=5 // pred_region
        %s441 = ssub.s32 %s29, 1
        // Predicated region
        $region13: #{tpu_custom_call.1} parent=11 // pred_check
          %p442 = pneg %p128
        $region14: #{tpu_custom_call.1} parent=11 // pred_check_branch
          %444 = sbr.rel (%p442) target = $region16
        $region15: #{tpu_custom_call.1} parent=11 // pred_region
          _
        $region16: #{tpu_custom_call.1} parent=11 // pred_fallthru
          _
        // Predicated region
        $region17: #{tpu_custom_call.1} parent=11 // pred_check
          %p445 = pneg %p149
        $region18: #{tpu_custom_call.1} parent=11 // pred_check_branch
          %447 = sbr.rel (%p445) target = $region20
        $region19: #{tpu_custom_call.1} parent=11 // pred_region
          _
        $region20: #{tpu_custom_call.1} parent=11 // pred_fallthru
          _
        // Predicated region
        $region21: #{tpu_custom_call.1} parent=11 // pred_check
          %p448 = pneg %p170
        $region22: #{tpu_custom_call.1} parent=11 // pred_check_branch
          %450 = sbr.rel (%p448) target = $region24
        $region23: #{tpu_custom_call.1} parent=11 // pred_region
          _
        $region24: #{tpu_custom_call.1} parent=11 // pred_fallthru
          _
        // Predicated region
        $region25: #{tpu_custom_call.1} parent=11 // pred_check
          %p451 = pneg %p191
        $region26: #{tpu_custom_call.1} parent=11 // pred_check_branch
          %453 = sbr.rel (%p451) target = $region28
        $region27: #{tpu_custom_call.1} parent=11 // pred_region
          _
        $region28: #{tpu_custom_call.1} parent=11 // pred_fallthru
          _
        // Predicated region
        $region29: #{tpu_custom_call.1} parent=11 // pred_check
          %p454 = pneg %p212
        $region30: #{tpu_custom_call.1} parent=11 // pred_check_branch
          %456 = sbr.rel (%p454) target = $region32
        $region31: #{tpu_custom_call.1} parent=11 // pred_region
          _
        $region32: #{tpu_custom_call.1} parent=11 // pred_fallthru
          _
        // Predicated region
        $region33: #{tpu_custom_call.1} parent=11 // pred_check
          %p457 = pneg %p233
        $region34: #{tpu_custom_call.1} parent=11 // pred_check_branch
          %459 = sbr.rel (%p457) target = $region36
        $region35: #{tpu_custom_call.1} parent=11 // pred_region
          _
        $region36: #{tpu_custom_call.1} parent=11 // pred_fallthru
          _
        // Predicated region
        $region37: #{tpu_custom_call.1} parent=11 // pred_check
          %p460 = pneg %p254
        $region38: #{tpu_custom_call.1} parent=11 // pred_check_branch
          %462 = sbr.rel (%p460) target = $region40
        $region39: #{tpu_custom_call.1} parent=11 // pred_region
          _
        $region40: #{tpu_custom_call.1} parent=11 // pred_fallthru
          _
        // Predicated region
        $region41: #{tpu_custom_call.1} parent=11 // pred_check
          %p463 = pneg %p275
        $region42: #{tpu_custom_call.1} parent=11 // pred_check_branch
          %465 = sbr.rel (%p463) target = $region44
        $region43: #{tpu_custom_call.1} parent=11 // pred_region
          _
        $region44: #{tpu_custom_call.1} parent=11 // pred_fallthru
          _
        // Predicated region
        $region45: #{tpu_custom_call.1} parent=11 // pred_check
          %p466 = pneg %p296
        $region46: #{tpu_custom_call.1} parent=11 // pred_check_branch
          %468 = sbr.rel (%p466) target = $region48
        $region47: #{tpu_custom_call.1} parent=11 // pred_region
          _
        $region48: #{tpu_custom_call.1} parent=11 // pred_fallthru
          _
        // Predicated region
        $region49: #{tpu_custom_call.1} parent=11 // pred_check
          %p469 = pneg %p317
        $region50: #{tpu_custom_call.1} parent=11 // pred_check_branch
          %471 = sbr.rel (%p469) target = $region52
        $region51: #{tpu_custom_call.1} parent=11 // pred_region
          _
        $region52: #{tpu_custom_call.1} parent=11 // pred_fallthru
          _
        // Predicated region
        $region53: #{tpu_custom_call.1} parent=11 // pred_check
          %p472 = pneg %p338
        $region54: #{tpu_custom_call.1} parent=11 // pred_check_branch
          %474 = sbr.rel (%p472) target = $region56
        $region55: #{tpu_custom_call.1} parent=11 // pred_region
          _
        $region56: #{tpu_custom_call.1} parent=11 // pred_fallthru
          _
        // Predicated region
        $region57: #{tpu_custom_call.1} parent=11 // pred_check
          %p475 = pneg %p359
        $region58: #{tpu_custom_call.1} parent=11 // pred_check_branch
          %477 = sbr.rel (%p475) target = $region60
        $region59: #{tpu_custom_call.1} parent=11 // pred_region
          _
        $region60: #{tpu_custom_call.1} parent=11 // pred_fallthru
          _
        // Predicated region
        $region61: #{tpu_custom_call.1} parent=11 // pred_check
          %p478 = pneg %p380
        $region62: #{tpu_custom_call.1} parent=11 // pred_check_branch
          %480 = sbr.rel (%p478) target = $region64
        $region63: #{tpu_custom_call.1} parent=11 // pred_region
          _
        $region64: #{tpu_custom_call.1} parent=11 // pred_fallthru
          _
        // Predicated region
        $region65: #{tpu_custom_call.1} parent=11 // pred_check
          %p481 = pneg %p401
        $region66: #{tpu_custom_call.1} parent=11 // pred_check_branch
          %483 = sbr.rel (%p481) target = $region68
        $region67: #{tpu_custom_call.1} parent=11 // pred_region
          _
        $region68: #{tpu_custom_call.1} parent=11 // pred_fallthru
          _
      $region12: #{tpu_custom_call.1} parent=5 // pred_fallthru
        _
      %p484 = scmp.lt.s32.totalorder %s29, 2
      // Predicated region
      $region69: #{tpu_custom_call.1} parent=5 // pred_check
        %p485 = pneg %p484
      $region70: #{tpu_custom_call.1} parent=5 // pred_check_branch
        %487 = sbr.rel (%p485) target = $region72
      $region71: #{tpu_custom_call.1} parent=5 // pred_region
        // Predicated region
        $region73: #{tpu_custom_call.1} parent=71 // pred_check
          %p488 = pneg %p49
        $region74: #{tpu_custom_call.1} parent=71 // pred_check_branch
          %490 = sbr.rel (%p488) target = $region76
        $region75: #{tpu_custom_call.1} parent=71 // pred_region
          %s491 = smul.u32 2, %s29
          %p492 = scmp.lt.s32.totalorder %s491, 3
          %s493 = scalar_select %p492, %s491, 3
          %s494 = smul.addr %s493, 8
          %s495 = scalar_lea.vmem %s0, %s494
          %s496 = smul.u32 2, %s29
        $region76: #{tpu_custom_call.1} parent=71 // pred_fallthru
          _
        // Predicated region
        $region77: #{tpu_custom_call.1} parent=71 // pred_check
          %p497 = pneg %p75
        $region78: #{tpu_custom_call.1} parent=71 // pred_check_branch
          %499 = sbr.rel (%p497) target = $region80
        $region79: #{tpu_custom_call.1} parent=71 // pred_region
          %s500 = sand.u32 %s65, 1
          %s501 = scalar_lea.sflag [#allocation3], %s500
          %s502 = sand.u32 %s65, 1
          %s503 = smul.addr %s502, 8
          %s504 = scalar_lea.vmem [#allocation2], %s503
          %s506 = ssub.s32 128, 128
          %507 = vsyncadd %s501, %s506
          %s508 = smul.addr %s29, 128
          %s509 = scalar_lea.hbm %s1, %s508
          %s511 = sshll.u32 %s504, 4
          %s512 = int_to_ptr.vmem [resolvable:$true] %s511
          %514 = dma.hbm_to_vmem [thread:$0]  %s509, 128, %s512, %s501
        $region80: #{tpu_custom_call.1} parent=71 // pred_fallthru
          _
        // Predicated region
        $region81: #{tpu_custom_call.1} parent=71 // pred_check
          %p515 = pneg %p101
        $region82: #{tpu_custom_call.1} parent=71 // pred_check_branch
          %517 = sbr.rel (%p515) target = $region84
        $region83: #{tpu_custom_call.1} parent=71 // pred_region
          %p518 = scmp.lt.s32.totalorder %s29, 1
          %s519 = scalar_select %p518, %s29, 1
          %s520 = scalar_lea.vmem %s2, %s519
        $region84: #{tpu_custom_call.1} parent=71 // pred_fallthru
          _
      $region72: #{tpu_custom_call.1} parent=5 // pred_fallthru
        _
      %p521 = scmp.le.s32.totalorder 1, %s29
      %p522 = scmp.lt.s32.totalorder %s29, 3
      %p523 = pnand %p521, %p522
      %p524 = pneg %p523
      // Predicated region
      $region85: #{tpu_custom_call.1} parent=5 // pred_check
        _
      $region86: #{tpu_custom_call.1} parent=5 // pred_check_branch
        %526 = sbr.rel (%p523) target = $region88
      $region87: #{tpu_custom_call.1} parent=5 // pred_region
        %s527 = ssub.s32 %s29, 1
        %s528 = sand.u32 %s68, 1
        %s529 = scalar_lea.sflag [#allocation3], %s528
        %s530 = sand.u32 %s68, 1
        %s531 = smul.addr %s530, 8
        %s532 = scalar_lea.vmem [#allocation2], %s531
        // Predicated region
        $region89: #{tpu_custom_call.1} parent=87 // pred_check
          %p533 = pneg %p81
        $region90: #{tpu_custom_call.1} parent=87 // pred_check_branch
          %535 = sbr.rel (%p533) target = $region92
        $region91: #{tpu_custom_call.1} parent=87 // pred_region
          %536 = dma.done %s529, 128
        $region92: #{tpu_custom_call.1} parent=87 // pred_fallthru
          _
        %s537 = smul.u32 2, %s34
        %p538 = scmp.lt.s32.totalorder %s537, 3
        %s539 = scalar_select %p538, %s537, 3
        %s540 = smul.addr %s539, 8
        %s541 = scalar_lea.vmem %s0, %s540
        %p542 = pneg %p55
        %p543 = pneg %p52
        %s544 = sand.u32 %s68, 1
        %s545 = scalar_lea.sflag [#allocation3], %s544
        %s546 = sand.u32 %s68, 1
        %s547 = smul.addr %s546, 8
        %s548 = scalar_lea.vmem [#allocation2], %s547
        %p549 = pneg %p81
        %p550 = pneg %p78
        %p551 = scmp.lt.s32.totalorder %s34, 1
        %s552 = scalar_select %p551, %s34, 1
        %s553 = scalar_lea.vmem %s2, %s552
        %p554 = pneg %p107
        %p555 = pneg %p104
        %p556 = pneg %p128
        %p557 = pneg %p125
        %p558 = pneg %p149
        %p559 = pneg %p146
        %p560 = pneg %p170
        %p561 = pneg %p167
        %p562 = pneg %p191
        %p563 = pneg %p188
        %p564 = pneg %p212
        %p565 = pneg %p209
        %p566 = pneg %p233
        %p567 = pneg %p230
        %p568 = pneg %p254
        %p569 = pneg %p251
        %p570 = pneg %p275
        %p571 = pneg %p272
        %p572 = pneg %p296
        %p573 = pneg %p293
        %p574 = pneg %p317
        %p575 = pneg %p314
        %p576 = pneg %p338
        %p577 = pneg %p335
        %p578 = pneg %p359
        %p579 = pneg %p356
        %p580 = pneg %p380
        %p581 = pneg %p377
        %p582 = pneg %p401
        %p583 = pneg %p398
        %p584 = pneg %p427
        %p585 = pneg %p424
        %s586 = sand.u32 %s414, 1
        %s587 = scalar_lea.sflag [#allocation4], %s586
        %s588 = sand.u32 %s414, 1
        %s589 = smul.addr %s588, 16
        %s590 = scalar_lea.vmem [#allocation5], %s589
        %s591 = smul.u32 2, %s34
        %p592 = scmp.lt.s32.totalorder %s591, 3
        %s593 = scalar_select %p592, %s591, 3
        %s594 = smul.addr %s593, 8
        %s595 = scalar_lea.vmem %s0, %s594
        %s596 = smul.u32 2, %s34
        %p597 = scmp.lt.s32.totalorder %s34, 1
        %s598 = scalar_select %p597, %s34, 1
        %s599 = scalar_lea.vmem %s2, %s598
        %s600 = smul.u32 2, %s34
        %v601 = vld [vmem:[%s3] sm:$0x1]
        %v602 = vld [vmem:[%s4] sm:$0x1]
        %v603 = vld [vmem:[%s5] sm:$0x1]
        %v604 = vld [vmem:[%s6] sm:$0x1]
        %v605 = vld [vmem:[%s11] sm:$0x1]
        %v606 = vld [vmem:[%s12] sm:$0x1]
        %v607 = vld [vmem:[%s10] sm:$0x1]
        %v608 = vld [vmem:[%s14] sm:$0x1]
        %v609 = vld [vmem:[%s16] sm:$0x1]
        %v610 = vld [vmem:[%s7] sm:$0xff]
        %v611 = vld [vmem:[%s7 + $0x8] sm:$0xff]
        %v612 = vld [vmem:[%s7 + $0x10] sm:$0xff]
        %v613 = vld [vmem:[%s7 + $0x18] sm:$0xff]
        %v614 = vld [vmem:[%s8] sm:$0xff]
        %v615 = vld [vmem:[%s8 + $0x8] sm:$0xff]
        %v616 = vld [vmem:[%s8 + $0x10] sm:$0xff]
        %v617 = vld [vmem:[%s8 + $0x18] sm:$0xff]
        %v618 = vld [vmem:[%s9] sm:$0xff]
        %v619 = vld [vmem:[%s9 + $0x8] sm:$0xff]
        %v620 = vld [vmem:[%s9 + $0x10] sm:$0xff]
        %v621 = vld [vmem:[%s9 + $0x18] sm:$0xff]
        %v622 = vld [vmem:[%s13] sm:$0xff]
        %v623 = vld [vmem:[%s13 + $0x8] sm:$0xff]
        %v624 = vld [vmem:[%s13 + $0x10] sm:$0xff]
        %v625 = vld [vmem:[%s13 + $0x18] sm:$0xff]
        %v626 = vld [vmem:[%s15] sm:$0xff]
        %v627 = vld [vmem:[%s15 + $0x8] sm:$0xff]
        %v628 = vld [vmem:[%s15 + $0x10] sm:$0xff]
        %v629 = vld [vmem:[%s15 + $0x18] sm:$0xff]
        %v630 = vld [vmem:[%s15 + $0x20] sm:$0xff]
        %v631 = vld [vmem:[%s15 + $0x28] sm:$0xff]
        %v632 = vld [vmem:[%s15 + $0x30] sm:$0xff]
        %v633 = vld [vmem:[%s15 + $0x38] sm:$0xff]
        %v634 = vld [vmem:[%s15 + $0x40] sm:$0xff]
        %v635 = vld [vmem:[%s15 + $0x48] sm:$0xff]
        %v636 = vld [vmem:[%s15 + $0x50] sm:$0xff]
        %v637 = vld [vmem:[%s15 + $0x58] sm:$0xff]
        %v638 = vld [vmem:[%s15 + $0x60] sm:$0xff]
        %v639 = vld [vmem:[%s15 + $0x68] sm:$0xff]
        %v640 = vld [vmem:[%s15 + $0x70] sm:$0xff]
        %v641 = vld [vmem:[%s15 + $0x78] sm:$0xff]
        %v642 = vld [vmem:[%s595] sm:$0xff]
        %v643 = vld [vmem:[%s595 + $0x8] sm:$0xff]
        %v644 = vld [vmem:[%s532] sm:$0xff]
        %v645 = vld [vmem:[%s599] sm:$0x1]
        %vm646 = vcmask 261120
        %v647 = vsel %vm646, %v642, 0.0
        %648 = vadd.xlane.f32.xlu0 %v647
        %v649 = vpop.xlane.xlu0 %648
        %v650 = vsel %vm646, %v643, 0.0
        %651 = vadd.xlane.f32.xlu0 %v650
        %v652 = vpop.xlane.xlu0 %651
        %v653 = vrcp.pop 32.0
        %v654 = vmul.f32 %v649, %v653
        %v655 = vmul.f32 %v652, %v653
        %v656 = vsub.f32 %v642, %v654
        %v657 = vsub.f32 %v643, %v655
        %v658 = vmul.f32 %v656, %v656
        %v659 = vmul.f32 %v657, %v657
        %v660 = vsel %vm646, %v658, 0.0
        %661 = vadd.xlane.f32.xlu0 %v660
        %v662 = vpop.xlane.xlu0 %661
        %v663 = vsel %vm646, %v659, 0.0
        %664 = vadd.xlane.f32.xlu0 %v663
        %v665 = vpop.xlane.xlu0 %664
        %v666 = vmul.f32 %v662, %v653
        %v667 = vmul.f32 %v665, %v653
        %v668 = vadd.f32 %v666, 1e-05
        %v669 = vadd.f32 %v667, 1e-05
        %v670 = vrsqrt.pop %v668
        %v671 = vrsqrt.pop %v669
        %v672 = vmul.f32 %v656, %v670
        %v673 = vmul.f32 %v657, %v671
        %v675 = vlaneseq
        %v676 = vshrl.u32 %v675, 7
        %v677 = vsub.s32 0, %v676
        %v678 = vrot.slane %v601, %v677
        %v680 = vmul.f32 %v672, %v678
        %v681 = vmul.f32 %v673, %v678
        %v683 = vlaneseq
        %v684 = vshrl.u32 %v683, 7
        %v685 = vsub.s32 0, %v684
        %v686 = vrot.slane %v602, %v685
        %v688 = vadd.f32 %v680, %v686
        %v689 = vadd.f32 %v681, %v686
        %v690 = vsel %vm646, %v644, 0.0
        %691 = vadd.xlane.f32.xlu0 %v690
        %v692 = vpop.xlane.xlu0 %691
        %v693 = vmul.f32 %v692, %v653
        %v694 = vsub.f32 %v644, %v693
        %v695 = vmul.f32 %v694, %v694
        %v696 = vsel %vm646, %v695, 0.0
        %697 = vadd.xlane.f32.xlu0 %v696
        %v698 = vpop.xlane.xlu0 %697
        %v699 = vmul.f32 %v698, %v653
        %v700 = vadd.f32 %v699, 1e-05
        %v701 = vrsqrt.pop %v700
        %v702 = vmul.f32 %v694, %v701
        %v704 = vlaneseq
        %v705 = vshrl.u32 %v704, 7
        %v706 = vsub.s32 0, %v705
        %v707 = vrot.slane %v603, %v706
        %v709 = vmul.f32 %v702, %v707
        %v711 = vlaneseq
        %v712 = vshrl.u32 %v711, 7
        %v713 = vsub.s32 0, %v712
        %v714 = vrot.slane %v604, %v713
        %v716 = vadd.f32 %v709, %v714
        %v718 = vsel %vm646, %v688, 0
        %v721 = vsel %vm646, %v689, 0
        %723 = vmatprep.subr.mxu0 0.0
        %724 = vmatpush1.msra.mxu0 0.0
        %725 = vmatprep.subr.mxu0 0.0
        %726 = vmatpush1.msra.mxu0 0.0
        %727 = vmatprep.subr.mxu0 0.0
        %728 = vmatpush1.msra.mxu0 0.0
        %729 = vmatprep.subr.mxu0 0.0
        %730 = vmatpush1.msra.mxu0 0.0
        %731 = vmatprep.subr.mxu0 0.0
        %732 = vmatpush1.msra.mxu0 0.0
        %733 = vmatprep.subr.mxu0 0.0
        %734 = vmatpush1.msra.mxu0 0.0
        %735 = vmatprep.subr.mxu0 0.0
        %736 = vmatpush1.msra.mxu0 0.0
        %737 = vmatprep.subr.mxu0 0.0
        %738 = vmatpush1.msra.mxu0 0.0
        %739 = vmatprep.subr.mxu0 0.0
        %740 = vmatpush1.msra.mxu0 0.0
        %741 = vmatprep.subr.mxu0 0.0
        %742 = vmatpush1.msra.mxu0 0.0
        %743 = vmatprep.subr.mxu0 0.0
        %744 = vmatpush1.msra.mxu0 0.0
        %745 = vmatprep.subr.mxu0 0.0
        %746 = vmatpush1.msra.mxu0 0.0
        %747 = vmatprep.subr.mxu0 0.0
        %748 = vmatpush1.msra.mxu0 %v613
        %749 = vmatprep.subr.mxu0 0.0
        %750 = vmatpush1.msra.mxu0 %v612
        %751 = vmatprep.subr.mxu0 0.0
        %752 = vmatpush1.msra.mxu0 %v611
        %753 = vmatprep.subr.mxu0 0.0
        %754 = vmatpush1.msra.mxu0 %v610
        %755 = vmatprep.subr.mxu0 0.0
        %756 = vmatpush2.msra.mxu0 0.0
        %757 = vmatprep.subr.mxu0 0.0
        %758 = vmatpush2.msra.mxu0 0.0
        %759 = vmatprep.subr.mxu0 0.0
        %760 = vmatpush2.msra.mxu0 0.0
        %761 = vmatprep.subr.mxu0 0.0
        %762 = vmatpush2.msra.mxu0 0.0
        %763 = vmatprep.subr.mxu0 0.0
        %764 = vmatpush2.msra.mxu0 0.0
        %765 = vmatprep.subr.mxu0 0.0
        %766 = vmatpush2.msra.mxu0 0.0
        %767 = vmatprep.subr.mxu0 0.0
        %768 = vmatpush2.msra.mxu0 0.0
        %769 = vmatprep.subr.mxu0 0.0
        %770 = vmatpush2.msra.mxu0 0.0
        %771 = vmatprep.subr.mxu0 0.0
        %772 = vmatpush2.msra.mxu0 0.0
        %773 = vmatprep.subr.mxu0 0.0
        %774 = vmatpush2.msra.mxu0 0.0
        %775 = vmatprep.subr.mxu0 0.0
        %776 = vmatpush2.msra.mxu0 0.0
        %777 = vmatprep.subr.mxu0 0.0
        %778 = vmatpush2.msra.mxu0 0.0
        %779 = vmatprep.subr.mxu0 0.0
        %780 = vmatpush2.msra.mxu0 0.0
        %781 = vmatprep.subr.mxu0 0.0
        %782 = vmatpush2.msra.mxu0 0.0
        %783 = vmatprep.subr.mxu0 0.0
        %784 = vmatpush2.msra.mxu0 0.0
        %785 = vmatprep.subr.mxu0 0.0
        %786 = vmatpush2.msra.mxu0 0.0
        %787 = vmatprep.mubr.f32.mxu0 0.0
        %788 = vmatmul.mubr.f32.gmra.mxu0 %v718
        %v789 = vpop.f32.mrf.mxu0
        %v790 = vadd.f32 0.0, %v789
        %v791 = vpop.f32.mrf.mxu0
        %792 = vmatprep.mubr.f32.mxu0 0.0
        %793 = vmatmul.mubr.f32.gmra.mxu0 %v721
        %v794 = vpop.f32.mrf.mxu0
        %v795 = vadd.f32 0.0, %v794
        %v796 = vpop.f32.mrf.mxu0
        %797 = vdwg.mxu0
        %v799 = vsel %vm646, %v716, 0
        %801 = vmatprep.subr.mxu0 0.0
        %802 = vmatpush1.msra.mxu0 0.0
        %803 = vmatprep.subr.mxu0 0.0
        %804 = vmatpush1.msra.mxu0 0.0
        %805 = vmatprep.subr.mxu0 0.0
        %806 = vmatpush1.msra.mxu0 0.0
        %807 = vmatprep.subr.mxu0 0.0
        %808 = vmatpush1.msra.mxu0 0.0
        %809 = vmatprep.subr.mxu0 0.0
        %810 = vmatpush1.msra.mxu0 0.0
        %811 = vmatprep.subr.mxu0 0.0
        %812 = vmatpush1.msra.mxu0 0.0
        %813 = vmatprep.subr.mxu0 0.0
        %814 = vmatpush1.msra.mxu0 0.0
        %815 = vmatprep.subr.mxu0 0.0
        %816 = vmatpush1.msra.mxu0 0.0
        %817 = vmatprep.subr.mxu0 0.0
        %818 = vmatpush1.msra.mxu0 0.0
        %819 = vmatprep.subr.mxu0 0.0
        %820 = vmatpush1.msra.mxu0 0.0
        %821 = vmatprep.subr.mxu0 0.0
        %822 = vmatpush1.msra.mxu0 0.0
        %823 = vmatprep.subr.mxu0 0.0
        %824 = vmatpush1.msra.mxu0 0.0
        %825 = vmatprep.subr.mxu0 0.0
        %826 = vmatpush1.msra.mxu0 %v617
        %827 = vmatprep.subr.mxu0 0.0
        %828 = vmatpush1.msra.mxu0 %v616
        %829 = vmatprep.subr.mxu0 0.0
        %830 = vmatpush1.msra.mxu0 %v615
        %831 = vmatprep.subr.mxu0 0.0
        %832 = vmatpush1.msra.mxu0 %v614
        %833 = vmatprep.subr.mxu0 0.0
        %834 = vmatpush2.msra.mxu0 0.0
        %835 = vmatprep.subr.mxu0 0.0
        %836 = vmatpush2.msra.mxu0 0.0
        %837 = vmatprep.subr.mxu0 0.0
        %838 = vmatpush2.msra.mxu0 0.0
        %839 = vmatprep.subr.mxu0 0.0
        %840 = vmatpush2.msra.mxu0 0.0
        %841 = vmatprep.subr.mxu0 0.0
        %842 = vmatpush2.msra.mxu0 0.0
        %843 = vmatprep.subr.mxu0 0.0
        %844 = vmatpush2.msra.mxu0 0.0
        %845 = vmatprep.subr.mxu0 0.0
        %846 = vmatpush2.msra.mxu0 0.0
        %847 = vmatprep.subr.mxu0 0.0
        %848 = vmatpush2.msra.mxu0 0.0
        %849 = vmatprep.subr.mxu0 0.0
        %850 = vmatpush2.msra.mxu0 0.0
        %851 = vmatprep.subr.mxu0 0.0
        %852 = vmatpush2.msra.mxu0 0.0
        %853 = vmatprep.subr.mxu0 0.0
        %854 = vmatpush2.msra.mxu0 0.0
        %855 = vmatprep.subr.mxu0 0.0
        %856 = vmatpush2.msra.mxu0 0.0
        %857 = vmatprep.subr.mxu0 0.0
        %858 = vmatpush2.msra.mxu0 0.0
        %859 = vmatprep.subr.mxu0 0.0
        %860 = vmatpush2.msra.mxu0 0.0
        %861 = vmatprep.subr.mxu0 0.0
        %862 = vmatpush2.msra.mxu0 0.0
        %863 = vmatprep.subr.mxu0 0.0
        %864 = vmatpush2.msra.mxu0 0.0
        %865 = vmatprep.mubr.f32.mxu0 0.0
        %866 = vmatmul.mubr.f32.gmra.mxu0 %v799
        %v867 = vpop.f32.mrf.mxu0
        %v868 = vadd.f32 0.0, %v867
        %v869 = vpop.f32.mrf.mxu0
        %870 = vdwg.mxu0
        %v872 = vlaneseq
        %v873 = vshrl.u32 %v872, 7
        %v874 = vsub.s32 0, %v873
        %v875 = vrot.slane %v645, %v874
        %vm877 = vcmask 64512
        %v879 = vsel %vm877, %v790, 0
        %v882 = vsel %vm877, %v795, 0
        %v885 = vsel %vm877, %v868, 0
        %887 = vmatprep.subr.mxu0 0.0
        %888 = vmatpush1.xpose.msra.mxu0 0.0
        %889 = vmatprep.subr.mxu0 0.0
        %890 = vmatpush1.xpose.msra.mxu0 0.0
        %891 = vmatprep.subr.mxu0 0.0
        %892 = vmatpush1.xpose.msra.mxu0 0.0
        %893 = vmatprep.subr.mxu0 0.0
        %894 = vmatpush1.xpose.msra.mxu0 0.0
        %895 = vmatprep.subr.mxu0 0.0
        %896 = vmatpush1.xpose.msra.mxu0 0.0
        %897 = vmatprep.subr.mxu0 0.0
        %898 = vmatpush1.xpose.msra.mxu0 0.0
        %899 = vmatprep.subr.mxu0 0.0
        %900 = vmatpush1.xpose.msra.mxu0 0.0
        %901 = vmatprep.subr.mxu0 0.0
        %902 = vmatpush1.xpose.msra.mxu0 0.0
        %903 = vmatprep.subr.mxu0 0.0
        %904 = vmatpush1.xpose.msra.mxu0 0.0
        %905 = vmatprep.subr.mxu0 0.0
        %906 = vmatpush1.xpose.msra.mxu0 0.0
        %907 = vmatprep.subr.mxu0 0.0
        %908 = vmatpush1.xpose.msra.mxu0 0.0
        %909 = vmatprep.subr.mxu0 0.0
        %910 = vmatpush1.xpose.msra.mxu0 0.0
        %911 = vmatprep.subr.mxu0 0.0
        %912 = vmatpush1.xpose.msra.mxu0 0.0
        %913 = vmatprep.subr.mxu0 0.0
        %914 = vmatpush1.xpose.msra.mxu0 0.0
        %915 = vmatprep.subr.mxu0 0.0
        %916 = vmatpush1.xpose.msra.mxu0 0.0
        %917 = vmatprep.subr.mxu0 0.0
        %918 = vmatpush1.xpose.msra.mxu0 %v885
        %919 = vmatprep.subr.mxu0 0.0
        %920 = vmatpush2.xpose.msra.mxu0 0.0
        %921 = vmatprep.subr.mxu0 0.0
        %922 = vmatpush2.xpose.msra.mxu0 0.0
        %923 = vmatprep.subr.mxu0 0.0
        %924 = vmatpush2.xpose.msra.mxu0 0.0
        %925 = vmatprep.subr.mxu0 0.0
        %926 = vmatpush2.xpose.msra.mxu0 0.0
        %927 = vmatprep.subr.mxu0 0.0
        %928 = vmatpush2.xpose.msra.mxu0 0.0
        %929 = vmatprep.subr.mxu0 0.0
        %930 = vmatpush2.xpose.msra.mxu0 0.0
        %931 = vmatprep.subr.mxu0 0.0
        %932 = vmatpush2.xpose.msra.mxu0 0.0
        %933 = vmatprep.subr.mxu0 0.0
        %934 = vmatpush2.xpose.msra.mxu0 0.0
        %935 = vmatprep.subr.mxu0 0.0
        %936 = vmatpush2.xpose.msra.mxu0 0.0
        %937 = vmatprep.subr.mxu0 0.0
        %938 = vmatpush2.xpose.msra.mxu0 0.0
        %939 = vmatprep.subr.mxu0 0.0
        %940 = vmatpush2.xpose.msra.mxu0 0.0
        %941 = vmatprep.subr.mxu0 0.0
        %942 = vmatpush2.xpose.msra.mxu0 0.0
        %943 = vmatprep.subr.mxu0 0.0
        %944 = vmatpush2.xpose.msra.mxu0 0.0
        %945 = vmatprep.subr.mxu0 0.0
        %946 = vmatpush2.xpose.msra.mxu0 0.0
        %947 = vmatprep.subr.mxu0 0.0
        %948 = vmatpush2.xpose.msra.mxu0 0.0
        %949 = vmatprep.subr.mxu0 0.0
        %950 = vmatpush2.xpose.msra.mxu0 0.0
        %951 = vmatprep.mubr.f32.mxu0 0.0
        %952 = vmatmul.mubr.f32.gmra.mxu0 %v879
        %v953 = vpop.f32.mrf.mxu0
        %v954 = vadd.f32 %v875, %v953
        %v955 = vpop.f32.mrf.mxu0
        %956 = vmatprep.mubr.f32.mxu0 0.0
        %957 = vmatmul.mubr.f32.gmra.mxu0 %v882
        %v958 = vpop.f32.mrf.mxu0
        %v959 = vadd.f32 %v875, %v958
        %v960 = vpop.f32.mrf.mxu0
        %961 = vdwg.mxu0
        %v962 = vsel %vm877, %v954, -inf
        %963 = vmax.xlane.f32.xlu0 %v962
        %v964 = vpop.xlane.xlu0 %963
        %v965 = vsel %vm877, %v959, -inf
        %966 = vmax.xlane.f32.xlu0 %v965
        %v967 = vpop.xlane.xlu0 %966
        %v968 = vsub.f32 %v954, %v964
        %v969 = vsub.f32 %v959, %v967
        %v970 = vmul.f32 %v968, 1.442695
        %v971 = vpow.pop %v970
        %v972 = vmul.f32 %v969, 1.442695
        %v973 = vpow.pop %v972
        %v974 = vsel %vm877, %v971, 0.0
        %975 = vadd.xlane.f32.xlu0 %v974
        %v976 = vpop.xlane.xlu0 %975
        %v977 = vsel %vm877, %v973, 0.0
        %978 = vadd.xlane.f32.xlu0 %v977
        %v979 = vpop.xlane.xlu0 %978
        %v980 = vrcp.pop %v976
        %v981 = vmul.f32 %v971, %v980
        %v982 = vrcp.pop %v979
        %v983 = vmul.f32 %v973, %v982
        %984 = vrot.lane.b32.xlu0 %v868, 96
        %v985 = vpop.permute.xlu0 %984
        %v988 = vsel %vm877, %v981, 0
        %v991 = vsel %vm877, %v983, 0
        %993 = vmatprep.subr.mxu0 0.0
        %994 = vmatpush1.msra.mxu0 0.0
        %995 = vmatprep.subr.mxu0 0.0
        %996 = vmatpush1.msra.mxu0 0.0
        %997 = vmatprep.subr.mxu0 0.0
        %998 = vmatpush1.msra.mxu0 0.0
        %999 = vmatprep.subr.mxu0 0.0
        %1000 = vmatpush1.msra.mxu0 0.0
        %1001 = vmatprep.subr.mxu0 0.0
        %1002 = vmatpush1.msra.mxu0 0.0
        %1003 = vmatprep.subr.mxu0 0.0
        %1004 = vmatpush1.msra.mxu0 0.0
        %1005 = vmatprep.subr.mxu0 0.0
        %1006 = vmatpush1.msra.mxu0 0.0
        %1007 = vmatprep.subr.mxu0 0.0
        %1008 = vmatpush1.msra.mxu0 0.0
        %1009 = vmatprep.subr.mxu0 0.0
        %1010 = vmatpush1.msra.mxu0 0.0
        %1011 = vmatprep.subr.mxu0 0.0
        %1012 = vmatpush1.msra.mxu0 0.0
        %1013 = vmatprep.subr.mxu0 0.0
        %1014 = vmatpush1.msra.mxu0 0.0
        %1015 = vmatprep.subr.mxu0 0.0
        %1016 = vmatpush1.msra.mxu0 0.0
        %1017 = vmatprep.subr.mxu0 0.0
        %1018 = vmatpush1.msra.mxu0 0.0
        %1019 = vmatprep.subr.mxu0 0.0
        %1020 = vmatpush1.msra.mxu0 0.0
        %1021 = vmatprep.subr.mxu0 0.0
        %1022 = vmatpush1.msra.mxu0 0.0
        %1023 = vmatprep.subr.mxu0 0.0
        %1024 = vmatpush1.msra.mxu0 %v985
        %1025 = vmatprep.subr.mxu0 0.0
        %1026 = vmatpush2.msra.mxu0 0.0
        %1027 = vmatprep.subr.mxu0 0.0
        %1028 = vmatpush2.msra.mxu0 0.0
        %1029 = vmatprep.subr.mxu0 0.0
        %1030 = vmatpush2.msra.mxu0 0.0
        %1031 = vmatprep.subr.mxu0 0.0
        %1032 = vmatpush2.msra.mxu0 0.0
        %1033 = vmatprep.subr.mxu0 0.0
        %1034 = vmatpush2.msra.mxu0 0.0
        %1035 = vmatprep.subr.mxu0 0.0
        %1036 = vmatpush2.msra.mxu0 0.0
        %1037 = vmatprep.subr.mxu0 0.0
        %1038 = vmatpush2.msra.mxu0 0.0
        %1039 = vmatprep.subr.mxu0 0.0
        %1040 = vmatpush2.msra.mxu0 0.0
        %1041 = vmatprep.subr.mxu0 0.0
        %1042 = vmatpush2.msra.mxu0 0.0
        %1043 = vmatprep.subr.mxu0 0.0
        %1044 = vmatpush2.msra.mxu0 0.0
        %1045 = vmatprep.subr.mxu0 0.0
        %1046 = vmatpush2.msra.mxu0 0.0
        %1047 = vmatprep.subr.mxu0 0.0
        %1048 = vmatpush2.msra.mxu0 0.0
        %1049 = vmatprep.subr.mxu0 0.0
        %1050 = vmatpush2.msra.mxu0 0.0
        %1051 = vmatprep.subr.mxu0 0.0
        %1052 = vmatpush2.msra.mxu0 0.0
        %1053 = vmatprep.subr.mxu0 0.0
        %1054 = vmatpush2.msra.mxu0 0.0
        %1055 = vmatprep.subr.mxu0 0.0
        %1056 = vmatpush2.msra.mxu0 0.0
        %1057 = vmatprep.mubr.f32.mxu0 0.0
        %1058 = vmatmul.mubr.f32.gmra.mxu0 %v988
        %v1059 = vpop.f32.mrf.mxu0
        %v1060 = vadd.f32 0.0, %v1059
        %v1061 = vpop.f32.mrf.mxu0
        %1062 = vmatprep.mubr.f32.mxu0 0.0
        %1063 = vmatmul.mubr.f32.gmra.mxu0 %v991
        %v1064 = vpop.f32.mrf.mxu0
        %v1065 = vadd.f32 0.0, %v1064
        %v1066 = vpop.f32.mrf.mxu0
        %1067 = vdwg.mxu0
        %1068 = vrot.lane.b32.xlu0 %v790, 120
        %v1069 = vpop.permute.xlu0 %1068
        %1070 = vrot.lane.b32.xlu0 %v795, 120
        %v1071 = vpop.permute.xlu0 %1070
        %1072 = vrot.lane.b32.xlu0 %v868, 120
        %v1073 = vpop.permute.xlu0 %1072
        %v1074 = vsel %vm877, %v1069, 0
        %v1076 = vsel %vm877, %v1071, 0
        %v1078 = vsel %vm877, %v1073, 0
        %1080 = vmatprep.subr.mxu0 0.0
        %1081 = vmatpush1.xpose.msra.mxu0 0.0
        %1082 = vmatprep.subr.mxu0 0.0
        %1083 = vmatpush1.xpose.msra.mxu0 0.0
        %1084 = vmatprep.subr.mxu0 0.0
        %1085 = vmatpush1.xpose.msra.mxu0 0.0
        %1086 = vmatprep.subr.mxu0 0.0
        %1087 = vmatpush1.xpose.msra.mxu0 0.0
        %1088 = vmatprep.subr.mxu0 0.0
        %1089 = vmatpush1.xpose.msra.mxu0 0.0
        %1090 = vmatprep.subr.mxu0 0.0
        %1091 = vmatpush1.xpose.msra.mxu0 0.0
        %1092 = vmatprep.subr.mxu0 0.0
        %1093 = vmatpush1.xpose.msra.mxu0 0.0
        %1094 = vmatprep.subr.mxu0 0.0
        %1095 = vmatpush1.xpose.msra.mxu0 0.0
        %1096 = vmatprep.subr.mxu0 0.0
        %1097 = vmatpush1.xpose.msra.mxu0 0.0
        %1098 = vmatprep.subr.mxu0 0.0
        %1099 = vmatpush1.xpose.msra.mxu0 0.0
        %1100 = vmatprep.subr.mxu0 0.0
        %1101 = vmatpush1.xpose.msra.mxu0 0.0
        %1102 = vmatprep.subr.mxu0 0.0
        %1103 = vmatpush1.xpose.msra.mxu0 0.0
        %1104 = vmatprep.subr.mxu0 0.0
        %1105 = vmatpush1.xpose.msra.mxu0 0.0
        %1106 = vmatprep.subr.mxu0 0.0
        %1107 = vmatpush1.xpose.msra.mxu0 0.0
        %1108 = vmatprep.subr.mxu0 0.0
        %1109 = vmatpush1.xpose.msra.mxu0 0.0
        %1110 = vmatprep.subr.mxu0 0.0
        %1111 = vmatpush1.xpose.msra.mxu0 %v1078
        %1112 = vmatprep.subr.mxu0 0.0
        %1113 = vmatpush2.xpose.msra.mxu0 0.0
        %1114 = vmatprep.subr.mxu0 0.0
        %1115 = vmatpush2.xpose.msra.mxu0 0.0
        %1116 = vmatprep.subr.mxu0 0.0
        %1117 = vmatpush2.xpose.msra.mxu0 0.0
        %1118 = vmatprep.subr.mxu0 0.0
        %1119 = vmatpush2.xpose.msra.mxu0 0.0
        %1120 = vmatprep.subr.mxu0 0.0
        %1121 = vmatpush2.xpose.msra.mxu0 0.0
        %1122 = vmatprep.subr.mxu0 0.0
        %1123 = vmatpush2.xpose.msra.mxu0 0.0
        %1124 = vmatprep.subr.mxu0 0.0
        %1125 = vmatpush2.xpose.msra.mxu0 0.0
        %1126 = vmatprep.subr.mxu0 0.0
        %1127 = vmatpush2.xpose.msra.mxu0 0.0
        %1128 = vmatprep.subr.mxu0 0.0
        %1129 = vmatpush2.xpose.msra.mxu0 0.0
        %1130 = vmatprep.subr.mxu0 0.0
        %1131 = vmatpush2.xpose.msra.mxu0 0.0
        %1132 = vmatprep.subr.mxu0 0.0
        %1133 = vmatpush2.xpose.msra.mxu0 0.0
        %1134 = vmatprep.subr.mxu0 0.0
        %1135 = vmatpush2.xpose.msra.mxu0 0.0
        %1136 = vmatprep.subr.mxu0 0.0
        %1137 = vmatpush2.xpose.msra.mxu0 0.0
        %1138 = vmatprep.subr.mxu0 0.0
        %1139 = vmatpush2.xpose.msra.mxu0 0.0
        %1140 = vmatprep.subr.mxu0 0.0
        %1141 = vmatpush2.xpose.msra.mxu0 0.0
        %1142 = vmatprep.subr.mxu0 0.0
        %1143 = vmatpush2.xpose.msra.mxu0 0.0
        %1144 = vmatprep.mubr.f32.mxu0 0.0
        %1145 = vmatmul.mubr.f32.gmra.mxu0 %v1074
        %v1146 = vpop.f32.mrf.mxu0
        %v1147 = vadd.f32 %v875, %v1146
        %v1148 = vpop.f32.mrf.mxu0
        %1149 = vmatprep.mubr.f32.mxu0 0.0
        %1150 = vmatmul.mubr.f32.gmra.mxu0 %v1076
        %v1151 = vpop.f32.mrf.mxu0
        %v1152 = vadd.f32 %v875, %v1151
        %v1153 = vpop.f32.mrf.mxu0
        %1154 = vdwg.mxu0
        %v1155 = vsel %vm877, %v1147, -inf
        %1156 = vmax.xlane.f32.xlu0 %v1155
        %v1157 = vpop.xlane.xlu0 %1156
        %v1158 = vsel %vm877, %v1152, -inf
        %1159 = vmax.xlane.f32.xlu0 %v1158
        %v1160 = vpop.xlane.xlu0 %1159
        %v1161 = vsub.f32 %v1147, %v1157
        %v1162 = vsub.f32 %v1152, %v1160
        %v1163 = vmul.f32 %v1161, 1.442695
        %v1164 = vpow.pop %v1163
        %v1165 = vmul.f32 %v1162, 1.442695
        %v1166 = vpow.pop %v1165
        %v1167 = vsel %vm877, %v1164, 0.0
        %1168 = vadd.xlane.f32.xlu0 %v1167
        %v1169 = vpop.xlane.xlu0 %1168
        %v1170 = vsel %vm877, %v1166, 0.0
        %1171 = vadd.xlane.f32.xlu0 %v1170
        %v1172 = vpop.xlane.xlu0 %1171
        %v1173 = vrcp.pop %v1169
        %v1174 = vmul.f32 %v1164, %v1173
        %v1175 = vrcp.pop %v1172
        %v1176 = vmul.f32 %v1166, %v1175
        %1177 = vrot.lane.b32.xlu0 %v868, 88
        %v1178 = vpop.permute.xlu0 %1177
        %v1181 = vsel %vm877, %v1174, 0
        %v1184 = vsel %vm877, %v1176, 0
        %1186 = vmatprep.subr.mxu0 0.0
        %1187 = vmatpush1.msra.mxu0 0.0
        %1188 = vmatprep.subr.mxu0 0.0
        %1189 = vmatpush1.msra.mxu0 0.0
        %1190 = vmatprep.subr.mxu0 0.0
        %1191 = vmatpush1.msra.mxu0 0.0
        %1192 = vmatprep.subr.mxu0 0.0
        %1193 = vmatpush1.msra.mxu0 0.0
        %1194 = vmatprep.subr.mxu0 0.0
        %1195 = vmatpush1.msra.mxu0 0.0
        %1196 = vmatprep.subr.mxu0 0.0
        %1197 = vmatpush1.msra.mxu0 0.0
        %1198 = vmatprep.subr.mxu0 0.0
        %1199 = vmatpush1.msra.mxu0 0.0
        %1200 = vmatprep.subr.mxu0 0.0
        %1201 = vmatpush1.msra.mxu0 0.0
        %1202 = vmatprep.subr.mxu0 0.0
        %1203 = vmatpush1.msra.mxu0 0.0
        %1204 = vmatprep.subr.mxu0 0.0
        %1205 = vmatpush1.msra.mxu0 0.0
        %1206 = vmatprep.subr.mxu0 0.0
        %1207 = vmatpush1.msra.mxu0 0.0
        %1208 = vmatprep.subr.mxu0 0.0
        %1209 = vmatpush1.msra.mxu0 0.0
        %1210 = vmatprep.subr.mxu0 0.0
        %1211 = vmatpush1.msra.mxu0 0.0
        %1212 = vmatprep.subr.mxu0 0.0
        %1213 = vmatpush1.msra.mxu0 0.0
        %1214 = vmatprep.subr.mxu0 0.0
        %1215 = vmatpush1.msra.mxu0 0.0
        %1216 = vmatprep.subr.mxu0 0.0
        %1217 = vmatpush1.msra.mxu0 %v1178
        %1218 = vmatprep.subr.mxu0 0.0
        %1219 = vmatpush2.msra.mxu0 0.0
        %1220 = vmatprep.subr.mxu0 0.0
        %1221 = vmatpush2.msra.mxu0 0.0
        %1222 = vmatprep.subr.mxu0 0.0
        %1223 = vmatpush2.msra.mxu0 0.0
        %1224 = vmatprep.subr.mxu0 0.0
        %1225 = vmatpush2.msra.mxu0 0.0
        %1226 = vmatprep.subr.mxu0 0.0
        %1227 = vmatpush2.msra.mxu0 0.0
        %1228 = vmatprep.subr.mxu0 0.0
        %1229 = vmatpush2.msra.mxu0 0.0
        %1230 = vmatprep.subr.mxu0 0.0
        %1231 = vmatpush2.msra.mxu0 0.0
        %1232 = vmatprep.subr.mxu0 0.0
        %1233 = vmatpush2.msra.mxu0 0.0
        %1234 = vmatprep.subr.mxu0 0.0
        %1235 = vmatpush2.msra.mxu0 0.0
        %1236 = vmatprep.subr.mxu0 0.0
        %1237 = vmatpush2.msra.mxu0 0.0
        %1238 = vmatprep.subr.mxu0 0.0
        %1239 = vmatpush2.msra.mxu0 0.0
        %1240 = vmatprep.subr.mxu0 0.0
        %1241 = vmatpush2.msra.mxu0 0.0
        %1242 = vmatprep.subr.mxu0 0.0
        %1243 = vmatpush2.msra.mxu0 0.0
        %1244 = vmatprep.subr.mxu0 0.0
        %1245 = vmatpush2.msra.mxu0 0.0
        %1246 = vmatprep.subr.mxu0 0.0
        %1247 = vmatpush2.msra.mxu0 0.0
        %1248 = vmatprep.subr.mxu0 0.0
        %1249 = vmatpush2.msra.mxu0 0.0
        %1250 = vmatprep.mubr.f32.mxu0 0.0
        %1251 = vmatmul.mubr.f32.gmra.mxu0 %v1181
        %v1252 = vpop.f32.mrf.mxu0
        %v1253 = vadd.f32 0.0, %v1252
        %v1254 = vpop.f32.mrf.mxu0
        %1255 = vmatprep.mubr.f32.mxu0 0.0
        %1256 = vmatmul.mubr.f32.gmra.mxu0 %v1184
        %v1257 = vpop.f32.mrf.mxu0
        %v1258 = vadd.f32 0.0, %v1257
        %v1259 = vpop.f32.mrf.mxu0
        %1260 = vdwg.mxu0
        %1261 = vrot.lane.b32.xlu0 %v790, 112
        %v1262 = vpop.permute.xlu0 %1261
        %1263 = vrot.lane.b32.xlu0 %v795, 112
        %v1264 = vpop.permute.xlu0 %1263
        %1265 = vrot.lane.b32.xlu0 %v868, 112
        %v1266 = vpop.permute.xlu0 %1265
        %v1267 = vsel %vm877, %v1262, 0
        %v1269 = vsel %vm877, %v1264, 0
        %v1271 = vsel %vm877, %v1266, 0
        %1273 = vmatprep.subr.mxu0 0.0
        %1274 = vmatpush1.xpose.msra.mxu0 0.0
        %1275 = vmatprep.subr.mxu0 0.0
        %1276 = vmatpush1.xpose.msra.mxu0 0.0
        %1277 = vmatprep.subr.mxu0 0.0
        %1278 = vmatpush1.xpose.msra.mxu0 0.0
        %1279 = vmatprep.subr.mxu0 0.0
        %1280 = vmatpush1.xpose.msra.mxu0 0.0
        %1281 = vmatprep.subr.mxu0 0.0
        %1282 = vmatpush1.xpose.msra.mxu0 0.0
        %1283 = vmatprep.subr.mxu0 0.0
        %1284 = vmatpush1.xpose.msra.mxu0 0.0
        %1285 = vmatprep.subr.mxu0 0.0
        %1286 = vmatpush1.xpose.msra.mxu0 0.0
        %1287 = vmatprep.subr.mxu0 0.0
        %1288 = vmatpush1.xpose.msra.mxu0 0.0
        %1289 = vmatprep.subr.mxu0 0.0
        %1290 = vmatpush1.xpose.msra.mxu0 0.0
        %1291 = vmatprep.subr.mxu0 0.0
        %1292 = vmatpush1.xpose.msra.mxu0 0.0
        %1293 = vmatprep.subr.mxu0 0.0
        %1294 = vmatpush1.xpose.msra.mxu0 0.0
        %1295 = vmatprep.subr.mxu0 0.0
        %1296 = vmatpush1.xpose.msra.mxu0 0.0
        %1297 = vmatprep.subr.mxu0 0.0
        %1298 = vmatpush1.xpose.msra.mxu0 0.0
        %1299 = vmatprep.subr.mxu0 0.0
        %1300 = vmatpush1.xpose.msra.mxu0 0.0
        %1301 = vmatprep.subr.mxu0 0.0
        %1302 = vmatpush1.xpose.msra.mxu0 0.0
        %1303 = vmatprep.subr.mxu0 0.0
        %1304 = vmatpush1.xpose.msra.mxu0 %v1271
        %1305 = vmatprep.subr.mxu0 0.0
        %1306 = vmatpush2.xpose.msra.mxu0 0.0
        %1307 = vmatprep.subr.mxu0 0.0
        %1308 = vmatpush2.xpose.msra.mxu0 0.0
        %1309 = vmatprep.subr.mxu0 0.0
        %1310 = vmatpush2.xpose.msra.mxu0 0.0
        %1311 = vmatprep.subr.mxu0 0.0
        %1312 = vmatpush2.xpose.msra.mxu0 0.0
        %1313 = vmatprep.subr.mxu0 0.0
        %1314 = vmatpush2.xpose.msra.mxu0 0.0
        %1315 = vmatprep.subr.mxu0 0.0
        %1316 = vmatpush2.xpose.msra.mxu0 0.0
        %1317 = vmatprep.subr.mxu0 0.0
        %1318 = vmatpush2.xpose.msra.mxu0 0.0
        %1319 = vmatprep.subr.mxu0 0.0
        %1320 = vmatpush2.xpose.msra.mxu0 0.0
        %1321 = vmatprep.subr.mxu0 0.0
        %1322 = vmatpush2.xpose.msra.mxu0 0.0
        %1323 = vmatprep.subr.mxu0 0.0
        %1324 = vmatpush2.xpose.msra.mxu0 0.0
        %1325 = vmatprep.subr.mxu0 0.0
        %1326 = vmatpush2.xpose.msra.mxu0 0.0
        %1327 = vmatprep.subr.mxu0 0.0
        %1328 = vmatpush2.xpose.msra.mxu0 0.0
        %1329 = vmatprep.subr.mxu0 0.0
        %1330 = vmatpush2.xpose.msra.mxu0 0.0
        %1331 = vmatprep.subr.mxu0 0.0
        %1332 = vmatpush2.xpose.msra.mxu0 0.0
        %1333 = vmatprep.subr.mxu0 0.0
        %1334 = vmatpush2.xpose.msra.mxu0 0.0
        %1335 = vmatprep.subr.mxu0 0.0
        %1336 = vmatpush2.xpose.msra.mxu0 0.0
        %1337 = vmatprep.mubr.f32.mxu0 0.0
        %1338 = vmatmul.mubr.f32.gmra.mxu0 %v1267
        %v1339 = vpop.f32.mrf.mxu0
        %v1340 = vadd.f32 %v875, %v1339
        %v1341 = vpop.f32.mrf.mxu0
        %1342 = vmatprep.mubr.f32.mxu0 0.0
        %1343 = vmatmul.mubr.f32.gmra.mxu0 %v1269
        %v1344 = vpop.f32.mrf.mxu0
        %v1345 = vadd.f32 %v875, %v1344
        %v1346 = vpop.f32.mrf.mxu0
        %1347 = vdwg.mxu0
        %v1348 = vsel %vm877, %v1340, -inf
        %1349 = vmax.xlane.f32.xlu0 %v1348
        %v1350 = vpop.xlane.xlu0 %1349
        %v1351 = vsel %vm877, %v1345, -inf
        %1352 = vmax.xlane.f32.xlu0 %v1351
        %v1353 = vpop.xlane.xlu0 %1352
        %v1354 = vsub.f32 %v1340, %v1350
        %v1355 = vsub.f32 %v1345, %v1353
        %v1356 = vmul.f32 %v1354, 1.442695
        %v1357 = vpow.pop %v1356
        %v1358 = vmul.f32 %v1355, 1.442695
        %v1359 = vpow.pop %v1358
        %v1360 = vsel %vm877, %v1357, 0.0
        %1361 = vadd.xlane.f32.xlu0 %v1360
        %v1362 = vpop.xlane.xlu0 %1361
        %v1363 = vsel %vm877, %v1359, 0.0
        %1364 = vadd.xlane.f32.xlu0 %v1363
        %v1365 = vpop.xlane.xlu0 %1364
        %v1366 = vrcp.pop %v1362
        %v1367 = vmul.f32 %v1357, %v1366
        %v1368 = vrcp.pop %v1365
        %v1369 = vmul.f32 %v1359, %v1368
        %1370 = vrot.lane.b32.xlu0 %v868, 80
        %v1371 = vpop.permute.xlu0 %1370
        %v1374 = vsel %vm877, %v1367, 0
        %v1377 = vsel %vm877, %v1369, 0
        %1379 = vmatprep.subr.mxu0 0.0
        %1380 = vmatpush1.msra.mxu0 0.0
        %1381 = vmatprep.subr.mxu0 0.0
        %1382 = vmatpush1.msra.mxu0 0.0
        %1383 = vmatprep.subr.mxu0 0.0
        %1384 = vmatpush1.msra.mxu0 0.0
        %1385 = vmatprep.subr.mxu0 0.0
        %1386 = vmatpush1.msra.mxu0 0.0
        %1387 = vmatprep.subr.mxu0 0.0
        %1388 = vmatpush1.msra.mxu0 0.0
        %1389 = vmatprep.subr.mxu0 0.0
        %1390 = vmatpush1.msra.mxu0 0.0
        %1391 = vmatprep.subr.mxu0 0.0
        %1392 = vmatpush1.msra.mxu0 0.0
        %1393 = vmatprep.subr.mxu0 0.0
        %1394 = vmatpush1.msra.mxu0 0.0
        %1395 = vmatprep.subr.mxu0 0.0
        %1396 = vmatpush1.msra.mxu0 0.0
        %1397 = vmatprep.subr.mxu0 0.0
        %1398 = vmatpush1.msra.mxu0 0.0
        %1399 = vmatprep.subr.mxu0 0.0
        %1400 = vmatpush1.msra.mxu0 0.0
        %1401 = vmatprep.subr.mxu0 0.0
        %1402 = vmatpush1.msra.mxu0 0.0
        %1403 = vmatprep.subr.mxu0 0.0
        %1404 = vmatpush1.msra.mxu0 0.0
        %1405 = vmatprep.subr.mxu0 0.0
        %1406 = vmatpush1.msra.mxu0 0.0
        %1407 = vmatprep.subr.mxu0 0.0
        %1408 = vmatpush1.msra.mxu0 0.0
        %1409 = vmatprep.subr.mxu0 0.0
        %1410 = vmatpush1.msra.mxu0 %v1371
        %1411 = vmatprep.subr.mxu0 0.0
        %1412 = vmatpush2.msra.mxu0 0.0
        %1413 = vmatprep.subr.mxu0 0.0
        %1414 = vmatpush2.msra.mxu0 0.0
        %1415 = vmatprep.subr.mxu0 0.0
        %1416 = vmatpush2.msra.mxu0 0.0
        %1417 = vmatprep.subr.mxu0 0.0
        %1418 = vmatpush2.msra.mxu0 0.0
        %1419 = vmatprep.subr.mxu0 0.0
        %1420 = vmatpush2.msra.mxu0 0.0
        %1421 = vmatprep.subr.mxu0 0.0
        %1422 = vmatpush2.msra.mxu0 0.0
        %1423 = vmatprep.subr.mxu0 0.0
        %1424 = vmatpush2.msra.mxu0 0.0
        %1425 = vmatprep.subr.mxu0 0.0
        %1426 = vmatpush2.msra.mxu0 0.0
        %1427 = vmatprep.subr.mxu0 0.0
        %1428 = vmatpush2.msra.mxu0 0.0
        %1429 = vmatprep.subr.mxu0 0.0
        %1430 = vmatpush2.msra.mxu0 0.0
        %1431 = vmatprep.subr.mxu0 0.0
        %1432 = vmatpush2.msra.mxu0 0.0
        %1433 = vmatprep.subr.mxu0 0.0
        %1434 = vmatpush2.msra.mxu0 0.0
        %1435 = vmatprep.subr.mxu0 0.0
        %1436 = vmatpush2.msra.mxu0 0.0
        %1437 = vmatprep.subr.mxu0 0.0
        %1438 = vmatpush2.msra.mxu0 0.0
        %1439 = vmatprep.subr.mxu0 0.0
        %1440 = vmatpush2.msra.mxu0 0.0
        %1441 = vmatprep.subr.mxu0 0.0
        %1442 = vmatpush2.msra.mxu0 0.0
        %1443 = vmatprep.mubr.f32.mxu0 0.0
        %1444 = vmatmul.mubr.f32.gmra.mxu0 %v1374
        %v1445 = vpop.f32.mrf.mxu0
        %v1446 = vadd.f32 0.0, %v1445
        %v1447 = vpop.f32.mrf.mxu0
        %1448 = vmatprep.mubr.f32.mxu0 0.0
        %1449 = vmatmul.mubr.f32.gmra.mxu0 %v1377
        %v1450 = vpop.f32.mrf.mxu0
        %v1451 = vadd.f32 0.0, %v1450
        %v1452 = vpop.f32.mrf.mxu0
        %1453 = vdwg.mxu0
        %1454 = vrot.lane.b32.xlu0 %v790, 104
        %v1455 = vpop.permute.xlu0 %1454
        %1456 = vrot.lane.b32.xlu0 %v795, 104
        %v1457 = vpop.permute.xlu0 %1456
        %1458 = vrot.lane.b32.xlu0 %v868, 104
        %v1459 = vpop.permute.xlu0 %1458
        %v1460 = vsel %vm877, %v1455, 0
        %v1462 = vsel %vm877, %v1457, 0
        %v1464 = vsel %vm877, %v1459, 0
        %1466 = vmatprep.subr.mxu0 0.0
        %1467 = vmatpush1.xpose.msra.mxu0 0.0
        %1468 = vmatprep.subr.mxu0 0.0
        %1469 = vmatpush1.xpose.msra.mxu0 0.0
        %1470 = vmatprep.subr.mxu0 0.0
        %1471 = vmatpush1.xpose.msra.mxu0 0.0
        %1472 = vmatprep.subr.mxu0 0.0
        %1473 = vmatpush1.xpose.msra.mxu0 0.0
        %1474 = vmatprep.subr.mxu0 0.0
        %1475 = vmatpush1.xpose.msra.mxu0 0.0
        %1476 = vmatprep.subr.mxu0 0.0
        %1477 = vmatpush1.xpose.msra.mxu0 0.0
        %1478 = vmatprep.subr.mxu0 0.0
        %1479 = vmatpush1.xpose.msra.mxu0 0.0
        %1480 = vmatprep.subr.mxu0 0.0
        %1481 = vmatpush1.xpose.msra.mxu0 0.0
        %1482 = vmatprep.subr.mxu0 0.0
        %1483 = vmatpush1.xpose.msra.mxu0 0.0
        %1484 = vmatprep.subr.mxu0 0.0
        %1485 = vmatpush1.xpose.msra.mxu0 0.0
        %1486 = vmatprep.subr.mxu0 0.0
        %1487 = vmatpush1.xpose.msra.mxu0 0.0
        %1488 = vmatprep.subr.mxu0 0.0
        %1489 = vmatpush1.xpose.msra.mxu0 0.0
        %1490 = vmatprep.subr.mxu0 0.0
        %1491 = vmatpush1.xpose.msra.mxu0 0.0
        %1492 = vmatprep.subr.mxu0 0.0
        %1493 = vmatpush1.xpose.msra.mxu0 0.0
        %1494 = vmatprep.subr.mxu0 0.0
        %1495 = vmatpush1.xpose.msra.mxu0 0.0
        %1496 = vmatprep.subr.mxu0 0.0
        %1497 = vmatpush1.xpose.msra.mxu0 %v1464
        %1498 = vmatprep.subr.mxu0 0.0
        %1499 = vmatpush2.xpose.msra.mxu0 0.0
        %1500 = vmatprep.subr.mxu0 0.0
        %1501 = vmatpush2.xpose.msra.mxu0 0.0
        %1502 = vmatprep.subr.mxu0 0.0
        %1503 = vmatpush2.xpose.msra.mxu0 0.0
        %1504 = vmatprep.subr.mxu0 0.0
        %1505 = vmatpush2.xpose.msra.mxu0 0.0
        %1506 = vmatprep.subr.mxu0 0.0
        %1507 = vmatpush2.xpose.msra.mxu0 0.0
        %1508 = vmatprep.subr.mxu0 0.0
        %1509 = vmatpush2.xpose.msra.mxu0 0.0
        %1510 = vmatprep.subr.mxu0 0.0
        %1511 = vmatpush2.xpose.msra.mxu0 0.0
        %1512 = vmatprep.subr.mxu0 0.0
        %1513 = vmatpush2.xpose.msra.mxu0 0.0
        %1514 = vmatprep.subr.mxu0 0.0
        %1515 = vmatpush2.xpose.msra.mxu0 0.0
        %1516 = vmatprep.subr.mxu0 0.0
        %1517 = vmatpush2.xpose.msra.mxu0 0.0
        %1518 = vmatprep.subr.mxu0 0.0
        %1519 = vmatpush2.xpose.msra.mxu0 0.0
        %1520 = vmatprep.subr.mxu0 0.0
        %1521 = vmatpush2.xpose.msra.mxu0 0.0
        %1522 = vmatprep.subr.mxu0 0.0
        %1523 = vmatpush2.xpose.msra.mxu0 0.0
        %1524 = vmatprep.subr.mxu0 0.0
        %1525 = vmatpush2.xpose.msra.mxu0 0.0
        %1526 = vmatprep.subr.mxu0 0.0
        %1527 = vmatpush2.xpose.msra.mxu0 0.0
        %1528 = vmatprep.subr.mxu0 0.0
        %1529 = vmatpush2.xpose.msra.mxu0 0.0
        %1530 = vmatprep.mubr.f32.mxu0 0.0
        %1531 = vmatmul.mubr.f32.gmra.mxu0 %v1460
        %v1532 = vpop.f32.mrf.mxu0
        %v1533 = vadd.f32 %v875, %v1532
        %v1534 = vpop.f32.mrf.mxu0
        %1535 = vmatprep.mubr.f32.mxu0 0.0
        %1536 = vmatmul.mubr.f32.gmra.mxu0 %v1462
        %v1537 = vpop.f32.mrf.mxu0
        %v1538 = vadd.f32 %v875, %v1537
        %v1539 = vpop.f32.mrf.mxu0
        %1540 = vdwg.mxu0
        %v1541 = vsel %vm877, %v1533, -inf
        %1542 = vmax.xlane.f32.xlu0 %v1541
        %v1543 = vpop.xlane.xlu0 %1542
        %v1544 = vsel %vm877, %v1538, -inf
        %1545 = vmax.xlane.f32.xlu0 %v1544
        %v1546 = vpop.xlane.xlu0 %1545
        %v1547 = vsub.f32 %v1533, %v1543
        %v1548 = vsub.f32 %v1538, %v1546
        %v1549 = vmul.f32 %v1547, 1.442695
        %v1550 = vpow.pop %v1549
        %v1551 = vmul.f32 %v1548, 1.442695
        %v1552 = vpow.pop %v1551
        %v1553 = vsel %vm877, %v1550, 0.0
        %1554 = vadd.xlane.f32.xlu0 %v1553
        %v1555 = vpop.xlane.xlu0 %1554
        %v1556 = vsel %vm877, %v1552, 0.0
        %1557 = vadd.xlane.f32.xlu0 %v1556
        %v1558 = vpop.xlane.xlu0 %1557
        %v1559 = vrcp.pop %v1555
        %v1560 = vmul.f32 %v1550, %v1559
        %v1561 = vrcp.pop %v1558
        %v1562 = vmul.f32 %v1552, %v1561
        %1563 = vrot.lane.b32.xlu0 %v868, 72
        %v1564 = vpop.permute.xlu0 %1563
        %v1567 = vsel %vm877, %v1560, 0
        %v1570 = vsel %vm877, %v1562, 0
        %1572 = vmatprep.subr.mxu0 0.0
        %1573 = vmatpush1.msra.mxu0 0.0
        %1574 = vmatprep.subr.mxu0 0.0
        %1575 = vmatpush1.msra.mxu0 0.0
        %1576 = vmatprep.subr.mxu0 0.0
        %1577 = vmatpush1.msra.mxu0 0.0
        %1578 = vmatprep.subr.mxu0 0.0
        %1579 = vmatpush1.msra.mxu0 0.0
        %1580 = vmatprep.subr.mxu0 0.0
        %1581 = vmatpush1.msra.mxu0 0.0
        %1582 = vmatprep.subr.mxu0 0.0
        %1583 = vmatpush1.msra.mxu0 0.0
        %1584 = vmatprep.subr.mxu0 0.0
        %1585 = vmatpush1.msra.mxu0 0.0
        %1586 = vmatprep.subr.mxu0 0.0
        %1587 = vmatpush1.msra.mxu0 0.0
        %1588 = vmatprep.subr.mxu0 0.0
        %1589 = vmatpush1.msra.mxu0 0.0
        %1590 = vmatprep.subr.mxu0 0.0
        %1591 = vmatpush1.msra.mxu0 0.0
        %1592 = vmatprep.subr.mxu0 0.0
        %1593 = vmatpush1.msra.mxu0 0.0
        %1594 = vmatprep.subr.mxu0 0.0
        %1595 = vmatpush1.msra.mxu0 0.0
        %1596 = vmatprep.subr.mxu0 0.0
        %1597 = vmatpush1.msra.mxu0 0.0
        %1598 = vmatprep.subr.mxu0 0.0
        %1599 = vmatpush1.msra.mxu0 0.0
        %1600 = vmatprep.subr.mxu0 0.0
        %1601 = vmatpush1.msra.mxu0 0.0
        %1602 = vmatprep.subr.mxu0 0.0
        %1603 = vmatpush1.msra.mxu0 %v1564
        %1604 = vmatprep.subr.mxu0 0.0
        %1605 = vmatpush2.msra.mxu0 0.0
        %1606 = vmatprep.subr.mxu0 0.0
        %1607 = vmatpush2.msra.mxu0 0.0
        %1608 = vmatprep.subr.mxu0 0.0
        %1609 = vmatpush2.msra.mxu0 0.0
        %1610 = vmatprep.subr.mxu0 0.0
        %1611 = vmatpush2.msra.mxu0 0.0
        %1612 = vmatprep.subr.mxu0 0.0
        %1613 = vmatpush2.msra.mxu0 0.0
        %1614 = vmatprep.subr.mxu0 0.0
        %1615 = vmatpush2.msra.mxu0 0.0
        %1616 = vmatprep.subr.mxu0 0.0
        %1617 = vmatpush2.msra.mxu0 0.0
        %1618 = vmatprep.subr.mxu0 0.0
        %1619 = vmatpush2.msra.mxu0 0.0
        %1620 = vmatprep.subr.mxu0 0.0
        %1621 = vmatpush2.msra.mxu0 0.0
        %1622 = vmatprep.subr.mxu0 0.0
        %1623 = vmatpush2.msra.mxu0 0.0
        %1624 = vmatprep.subr.mxu0 0.0
        %1625 = vmatpush2.msra.mxu0 0.0
        %1626 = vmatprep.subr.mxu0 0.0
        %1627 = vmatpush2.msra.mxu0 0.0
        %1628 = vmatprep.subr.mxu0 0.0
        %1629 = vmatpush2.msra.mxu0 0.0
        %1630 = vmatprep.subr.mxu0 0.0
        %1631 = vmatpush2.msra.mxu0 0.0
        %1632 = vmatprep.subr.mxu0 0.0
        %1633 = vmatpush2.msra.mxu0 0.0
        %1634 = vmatprep.subr.mxu0 0.0
        %1635 = vmatpush2.msra.mxu0 0.0
        %1636 = vmatprep.mubr.f32.mxu0 0.0
        %1637 = vmatmul.mubr.f32.gmra.mxu0 %v1567
        %v1638 = vpop.f32.mrf.mxu0
        %v1639 = vadd.f32 0.0, %v1638
        %v1640 = vpop.f32.mrf.mxu0
        %1641 = vmatprep.mubr.f32.mxu0 0.0
        %1642 = vmatmul.mubr.f32.gmra.mxu0 %v1570
        %v1643 = vpop.f32.mrf.mxu0
        %v1644 = vadd.f32 0.0, %v1643
        %v1645 = vpop.f32.mrf.mxu0
        %1646 = vdwg.mxu0
        %1649 = vrot.lane.b32.xlu0 %v1253, 8
        %v1650 = vpop.permute.xlu0 %1649
        %1651 = vrot.lane.b32.xlu0 %v1258, 8
        %v1652 = vpop.permute.xlu0 %1651
        %1657 = vrot.lane.b32.xlu0 %v1446, 16
        %v1658 = vpop.permute.xlu0 %1657
        %1659 = vrot.lane.b32.xlu0 %v1451, 16
        %v1660 = vpop.permute.xlu0 %1659
        %1665 = vrot.lane.b32.xlu0 %v1639, 24
        %v1666 = vpop.permute.xlu0 %1665
        %1667 = vrot.lane.b32.xlu0 %v1644, 24
        %v1668 = vpop.permute.xlu0 %1667
        %v1671 = vsel %vm877, %v1060, %v1650
        %v1672 = vsel %vm877, %v1065, %v1652
        %vm1673 = vcmask 130048
        %v1674 = vsel %vm1673, %v1671, %v1658
        %v1675 = vsel %vm1673, %v1672, %v1660
        %vm1676 = vcmask 195584
        %v1677 = vsel %vm1676, %v1674, %v1666
        %v1678 = vsel %vm1676, %v1675, %v1668
        %v1680 = vlaneseq
        %v1681 = vshrl.u32 %v1680, 7
        %v1682 = vsub.s32 0, %v1681
        %v1683 = vrot.slane %v607, %v1682
        %v1686 = vsel %vm646, %v1677, 0
        %v1689 = vsel %vm646, %v1678, 0
        %1691 = vmatprep.subr.mxu0 0.0
        %1692 = vmatpush1.msra.mxu0 0.0
        %1693 = vmatprep.subr.mxu0 0.0
        %1694 = vmatpush1.msra.mxu0 0.0
        %1695 = vmatprep.subr.mxu0 0.0
        %1696 = vmatpush1.msra.mxu0 0.0
        %1697 = vmatprep.subr.mxu0 0.0
        %1698 = vmatpush1.msra.mxu0 0.0
        %1699 = vmatprep.subr.mxu0 0.0
        %1700 = vmatpush1.msra.mxu0 0.0
        %1701 = vmatprep.subr.mxu0 0.0
        %1702 = vmatpush1.msra.mxu0 0.0
        %1703 = vmatprep.subr.mxu0 0.0
        %1704 = vmatpush1.msra.mxu0 0.0
        %1705 = vmatprep.subr.mxu0 0.0
        %1706 = vmatpush1.msra.mxu0 0.0
        %1707 = vmatprep.subr.mxu0 0.0
        %1708 = vmatpush1.msra.mxu0 0.0
        %1709 = vmatprep.subr.mxu0 0.0
        %1710 = vmatpush1.msra.mxu0 0.0
        %1711 = vmatprep.subr.mxu0 0.0
        %1712 = vmatpush1.msra.mxu0 0.0
        %1713 = vmatprep.subr.mxu0 0.0
        %1714 = vmatpush1.msra.mxu0 0.0
        %1715 = vmatprep.subr.mxu0 0.0
        %1716 = vmatpush1.msra.mxu0 %v621
        %1717 = vmatprep.subr.mxu0 0.0
        %1718 = vmatpush1.msra.mxu0 %v620
        %1719 = vmatprep.subr.mxu0 0.0
        %1720 = vmatpush1.msra.mxu0 %v619
        %1721 = vmatprep.subr.mxu0 0.0
        %1722 = vmatpush1.msra.mxu0 %v618
        %1723 = vmatprep.subr.mxu0 0.0
        %1724 = vmatpush2.msra.mxu0 0.0
        %1725 = vmatprep.subr.mxu0 0.0
        %1726 = vmatpush2.msra.mxu0 0.0
        %1727 = vmatprep.subr.mxu0 0.0
        %1728 = vmatpush2.msra.mxu0 0.0
        %1729 = vmatprep.subr.mxu0 0.0
        %1730 = vmatpush2.msra.mxu0 0.0
        %1731 = vmatprep.subr.mxu0 0.0
        %1732 = vmatpush2.msra.mxu0 0.0
        %1733 = vmatprep.subr.mxu0 0.0
        %1734 = vmatpush2.msra.mxu0 0.0
        %1735 = vmatprep.subr.mxu0 0.0
        %1736 = vmatpush2.msra.mxu0 0.0
        %1737 = vmatprep.subr.mxu0 0.0
        %1738 = vmatpush2.msra.mxu0 0.0
        %1739 = vmatprep.subr.mxu0 0.0
        %1740 = vmatpush2.msra.mxu0 0.0
        %1741 = vmatprep.subr.mxu0 0.0
        %1742 = vmatpush2.msra.mxu0 0.0
        %1743 = vmatprep.subr.mxu0 0.0
        %1744 = vmatpush2.msra.mxu0 0.0
        %1745 = vmatprep.subr.mxu0 0.0
        %1746 = vmatpush2.msra.mxu0 0.0
        %1747 = vmatprep.subr.mxu0 0.0
        %1748 = vmatpush2.msra.mxu0 0.0
        %1749 = vmatprep.subr.mxu0 0.0
        %1750 = vmatpush2.msra.mxu0 0.0
        %1751 = vmatprep.subr.mxu0 0.0
        %1752 = vmatpush2.msra.mxu0 0.0
        %1753 = vmatprep.subr.mxu0 0.0
        %1754 = vmatpush2.msra.mxu0 0.0
        %1755 = vmatprep.mubr.f32.mxu0 0.0
        %1756 = vmatmul.mubr.f32.gmra.mxu0 %v1686
        %v1757 = vpop.f32.mrf.mxu0
        %v1758 = vadd.f32 %v1683, %v1757
        %v1759 = vpop.f32.mrf.mxu0
        %1760 = vmatprep.mubr.f32.mxu0 0.0
        %1761 = vmatmul.mubr.f32.gmra.mxu0 %v1689
        %v1762 = vpop.f32.mrf.mxu0
        %v1763 = vadd.f32 %v1683, %v1762
        %v1764 = vpop.f32.mrf.mxu0
        %1765 = vdwg.mxu0
        %v1766 = vadd.f32 %v642, %v1758
        %v1767 = vadd.f32 %v643, %v1763
        %v1768 = vsel %vm646, %v1766, 0.0
        %1769 = vadd.xlane.f32.xlu0 %v1768
        %v1770 = vpop.xlane.xlu0 %1769
        %v1771 = vsel %vm646, %v1767, 0.0
        %1772 = vadd.xlane.f32.xlu0 %v1771
        %v1773 = vpop.xlane.xlu0 %1772
        %v1774 = vmul.f32 %v1770, %v653
        %v1775 = vmul.f32 %v1773, %v653
        %v1776 = vsub.f32 %v1766, %v1774
        %v1777 = vsub.f32 %v1767, %v1775
        %v1778 = vmul.f32 %v1776, %v1776
        %v1779 = vmul.f32 %v1777, %v1777
        %v1780 = vsel %vm646, %v1778, 0.0
        %1781 = vadd.xlane.f32.xlu0 %v1780
        %v1782 = vpop.xlane.xlu0 %1781
        %v1783 = vsel %vm646, %v1779, 0.0
        %1784 = vadd.xlane.f32.xlu0 %v1783
        %v1785 = vpop.xlane.xlu0 %1784
        %v1786 = vmul.f32 %v1782, %v653
        %v1787 = vmul.f32 %v1785, %v653
        %v1788 = vadd.f32 %v1786, 1e-05
        %v1789 = vadd.f32 %v1787, 1e-05
        %v1790 = vrsqrt.pop %v1788
        %v1791 = vrsqrt.pop %v1789
        %v1792 = vmul.f32 %v1776, %v1790
        %v1793 = vmul.f32 %v1777, %v1791
        %v1795 = vlaneseq
        %v1796 = vshrl.u32 %v1795, 7
        %v1797 = vsub.s32 0, %v1796
        %v1798 = vrot.slane %v605, %v1797
        %v1800 = vmul.f32 %v1792, %v1798
        %v1801 = vmul.f32 %v1793, %v1798
        %v1803 = vlaneseq
        %v1804 = vshrl.u32 %v1803, 7
        %v1805 = vsub.s32 0, %v1804
        %v1806 = vrot.slane %v606, %v1805
        %v1808 = vadd.f32 %v1800, %v1806
        %v1809 = vadd.f32 %v1801, %v1806
        %v1811 = vlaneseq
        %v1812 = vshrl.u32 %v1811, 7
        %v1813 = vsub.s32 0, %v1812
        %v1814 = vrot.slane %v608, %v1813
        %v1817 = vsel %vm646, %v1808, 0
        %v1820 = vsel %vm646, %v1809, 0
        %1822 = vmatprep.subr.mxu0 0.0
        %1823 = vmatpush1.msra.mxu0 0.0
        %1824 = vmatprep.subr.mxu0 0.0
        %1825 = vmatpush1.msra.mxu0 0.0
        %1826 = vmatprep.subr.mxu0 0.0
        %1827 = vmatpush1.msra.mxu0 0.0
        %1828 = vmatprep.subr.mxu0 0.0
        %1829 = vmatpush1.msra.mxu0 0.0
        %1830 = vmatprep.subr.mxu0 0.0
        %1831 = vmatpush1.msra.mxu0 0.0
        %1832 = vmatprep.subr.mxu0 0.0
        %1833 = vmatpush1.msra.mxu0 0.0
        %1834 = vmatprep.subr.mxu0 0.0
        %1835 = vmatpush1.msra.mxu0 0.0
        %1836 = vmatprep.subr.mxu0 0.0
        %1837 = vmatpush1.msra.mxu0 0.0
        %1838 = vmatprep.subr.mxu0 0.0
        %1839 = vmatpush1.msra.mxu0 0.0
        %1840 = vmatprep.subr.mxu0 0.0
        %1841 = vmatpush1.msra.mxu0 0.0
        %1842 = vmatprep.subr.mxu0 0.0
        %1843 = vmatpush1.msra.mxu0 0.0
        %1844 = vmatprep.subr.mxu0 0.0
        %1845 = vmatpush1.msra.mxu0 0.0
        %1846 = vmatprep.subr.mxu0 0.0
        %1847 = vmatpush1.msra.mxu0 %v625
        %1848 = vmatprep.subr.mxu0 0.0
        %1849 = vmatpush1.msra.mxu0 %v624
        %1850 = vmatprep.subr.mxu0 0.0
        %1851 = vmatpush1.msra.mxu0 %v623
        %1852 = vmatprep.subr.mxu0 0.0
        %1853 = vmatpush1.msra.mxu0 %v622
        %1854 = vmatprep.subr.mxu0 0.0
        %1855 = vmatpush2.msra.mxu0 0.0
        %1856 = vmatprep.subr.mxu0 0.0
        %1857 = vmatpush2.msra.mxu0 0.0
        %1858 = vmatprep.subr.mxu0 0.0
        %1859 = vmatpush2.msra.mxu0 0.0
        %1860 = vmatprep.subr.mxu0 0.0
        %1861 = vmatpush2.msra.mxu0 0.0
        %1862 = vmatprep.subr.mxu0 0.0
        %1863 = vmatpush2.msra.mxu0 0.0
        %1864 = vmatprep.subr.mxu0 0.0
        %1865 = vmatpush2.msra.mxu0 0.0
        %1866 = vmatprep.subr.mxu0 0.0
        %1867 = vmatpush2.msra.mxu0 0.0
        %1868 = vmatprep.subr.mxu0 0.0
        %1869 = vmatpush2.msra.mxu0 0.0
        %1870 = vmatprep.subr.mxu0 0.0
        %1871 = vmatpush2.msra.mxu0 0.0
        %1872 = vmatprep.subr.mxu0 0.0
        %1873 = vmatpush2.msra.mxu0 0.0
        %1874 = vmatprep.subr.mxu0 0.0
        %1875 = vmatpush2.msra.mxu0 0.0
        %1876 = vmatprep.subr.mxu0 0.0
        %1877 = vmatpush2.msra.mxu0 0.0
        %1878 = vmatprep.subr.mxu0 0.0
        %1879 = vmatpush2.msra.mxu0 0.0
        %1880 = vmatprep.subr.mxu0 0.0
        %1881 = vmatpush2.msra.mxu0 0.0
        %1882 = vmatprep.subr.mxu0 0.0
        %1883 = vmatpush2.msra.mxu0 0.0
        %1884 = vmatprep.subr.mxu0 0.0
        %1885 = vmatpush2.msra.mxu0 0.0
        %1886 = vmatprep.mubr.f32.mxu0 0.0
        %1887 = vmatmul.mubr.f32.gmra.mxu0 %v1817
        %v1888 = vpop.f32.mrf.mxu0
        %v1889 = vadd.f32 %v1814, %v1888
        %v1890 = vpop.f32.mrf.mxu0
        %1891 = vmatprep.mubr.f32.mxu0 0.0
        %1892 = vmatmul.mubr.f32.gmra.mxu0 %v1820
        %v1893 = vpop.f32.mrf.mxu0
        %v1894 = vadd.f32 %v1814, %v1893
        %v1895 = vpop.f32.mrf.mxu0
        %1896 = vdwg.mxu0
        %v1897 = vmul.f32 %v1889, 0.5
        %v1898 = vmul.f32 %v1894, 0.5
        %v1899 = vmul.f32 %v1889, 0.70710677
        %v1900 = vmul.f32 %v1894, 0.70710677
        %v1901 = verf.f32.pop %v1899
        %v1902 = verf.f32.pop %v1900
        %v1903 = vadd.f32 %v1901, 1.0
        %v1904 = vadd.f32 %v1902, 1.0
        %v1905 = vmul.f32 %v1897, %v1903
        %v1906 = vmul.f32 %v1898, %v1904
        %v1908 = vlaneseq
        %v1909 = vshrl.u32 %v1908, 7
        %v1910 = vsub.s32 0, %v1909
        %v1911 = vrot.slane %v609, %v1910
        %1913 = vmatprep.subr.mxu0 0.0
        %1914 = vmatpush1.msra.mxu0 %v641
        %1915 = vmatprep.subr.mxu0 0.0
        %1916 = vmatpush1.msra.mxu0 %v640
        %1917 = vmatprep.subr.mxu0 0.0
        %1918 = vmatpush1.msra.mxu0 %v639
        %1919 = vmatprep.subr.mxu0 0.0
        %1920 = vmatpush1.msra.mxu0 %v638
        %1921 = vmatprep.subr.mxu0 0.0
        %1922 = vmatpush1.msra.mxu0 %v637
        %1923 = vmatprep.subr.mxu0 0.0
        %1924 = vmatpush1.msra.mxu0 %v636
        %1925 = vmatprep.subr.mxu0 0.0
        %1926 = vmatpush1.msra.mxu0 %v635
        %1927 = vmatprep.subr.mxu0 0.0
        %1928 = vmatpush1.msra.mxu0 %v634
        %1929 = vmatprep.subr.mxu0 0.0
        %1930 = vmatpush1.msra.mxu0 %v633
        %1931 = vmatprep.subr.mxu0 0.0
        %1932 = vmatpush1.msra.mxu0 %v632
        %1933 = vmatprep.subr.mxu0 0.0
        %1934 = vmatpush1.msra.mxu0 %v631
        %1935 = vmatprep.subr.mxu0 0.0
        %1936 = vmatpush1.msra.mxu0 %v630
        %1937 = vmatprep.subr.mxu0 0.0
        %1938 = vmatpush1.msra.mxu0 %v629
        %1939 = vmatprep.subr.mxu0 0.0
        %1940 = vmatpush1.msra.mxu0 %v628
        %1941 = vmatprep.subr.mxu0 0.0
        %1942 = vmatpush1.msra.mxu0 %v627
        %1943 = vmatprep.subr.mxu0 0.0
        %1944 = vmatpush1.msra.mxu0 %v626
        %1945 = vmatprep.subr.mxu0 0.0
        %1946 = vmatpush2.msra.mxu0 0.0
        %1947 = vmatprep.subr.mxu0 0.0
        %1948 = vmatpush2.msra.mxu0 0.0
        %1949 = vmatprep.subr.mxu0 0.0
        %1950 = vmatpush2.msra.mxu0 0.0
        %1951 = vmatprep.subr.mxu0 0.0
        %1952 = vmatpush2.msra.mxu0 0.0
        %1953 = vmatprep.subr.mxu0 0.0
        %1954 = vmatpush2.msra.mxu0 0.0
        %1955 = vmatprep.subr.mxu0 0.0
        %1956 = vmatpush2.msra.mxu0 0.0
        %1957 = vmatprep.subr.mxu0 0.0
        %1958 = vmatpush2.msra.mxu0 0.0
        %1959 = vmatprep.subr.mxu0 0.0
        %1960 = vmatpush2.msra.mxu0 0.0
        %1961 = vmatprep.subr.mxu0 0.0
        %1962 = vmatpush2.msra.mxu0 0.0
        %1963 = vmatprep.subr.mxu0 0.0
        %1964 = vmatpush2.msra.mxu0 0.0
        %1965 = vmatprep.subr.mxu0 0.0
        %1966 = vmatpush2.msra.mxu0 0.0
        %1967 = vmatprep.subr.mxu0 0.0
        %1968 = vmatpush2.msra.mxu0 0.0
        %1969 = vmatprep.subr.mxu0 0.0
        %1970 = vmatpush2.msra.mxu0 0.0
        %1971 = vmatprep.subr.mxu0 0.0
        %1972 = vmatpush2.msra.mxu0 0.0
        %1973 = vmatprep.subr.mxu0 0.0
        %1974 = vmatpush2.msra.mxu0 0.0
        %1975 = vmatprep.subr.mxu0 0.0
        %1976 = vmatpush2.msra.mxu0 0.0
        %1977 = vmatprep.mubr.f32.mxu0 0.0
        %1978 = vmatmul.mubr.f32.gmra.mxu0 %v1905
        %v1979 = vpop.f32.mrf.mxu0
        %v1980 = vadd.f32 %v1911, %v1979
        %v1981 = vpop.f32.mrf.mxu0
        %1982 = vmatprep.mubr.f32.mxu0 0.0
        %1983 = vmatmul.mubr.f32.gmra.mxu0 %v1906
        %v1984 = vpop.f32.mrf.mxu0
        %v1985 = vadd.f32 %v1911, %v1984
        %v1986 = vpop.f32.mrf.mxu0
        %1987 = vdwg.mxu0
        %v1988 = vadd.f32 %v1766, %v1980
        %v1989 = vadd.f32 %v1767, %v1985
        %1990 = vst.msk [vmem:[%s590] sm:$0xff] %vm646, %v1988
        %1991 = vst.msk [vmem:[%s590 + $0x8] sm:$0xff] %vm646, %v1989
        %s1992 = sand.u32 %s414, 1
        %s1993 = scalar_lea.sflag [#allocation4], %s1992
        %s1994 = sand.u32 %s414, 1
        %s1995 = smul.addr %s1994, 16
        %s1996 = scalar_lea.vmem [#allocation5], %s1995
        // Predicated region
        $region93: #{tpu_custom_call.1} parent=87 // pred_check
          %p1997 = pneg %p424
        $region94: #{tpu_custom_call.1} parent=87 // pred_check_branch
          %1999 = sbr.rel (%p1997) target = $region96
        $region95: #{tpu_custom_call.1} parent=87 // pred_region
          %s2000 = smul.u32 2, %s34
          %s2002 = ssub.s32 256, 256
          %2003 = vsyncadd %s1993, %s2002
          %s2004 = smul.addr %s2000, 128
          %s2005 = scalar_lea.hbm %s17, %s2004
          %s2006 = sshll.u32 %s1996, 4
          %s2007 = int_to_ptr.vmem [resolvable:$true] %s2006
          %2012 = dma.vmem_to_hbm [thread:$0]  %s2007, 256, %s2005, %s1993, 128, 128, 8
        $region96: #{tpu_custom_call.1} parent=87 // pred_fallthru
          _
      $region88: #{tpu_custom_call.1} parent=5 // pred_fallthru
        _
      %p2013 = scmp.le.s32.totalorder 2, %s29
      // Predicated region
      $region97: #{tpu_custom_call.1} parent=5 // pred_check
        %p2014 = pneg %p2013
      $region98: #{tpu_custom_call.1} parent=5 // pred_check_branch
        %2016 = sbr.rel (%p2014) target = $region100
      $region99: #{tpu_custom_call.1} parent=5 // pred_region
        %s2017 = ssub.s32 %s29, 2
        // Predicated region
        $region101: #{tpu_custom_call.1} parent=99 // pred_check
          %p2018 = pneg %p430
        $region102: #{tpu_custom_call.1} parent=99 // pred_check_branch
          %2020 = sbr.rel (%p2018) target = $region104
        $region103: #{tpu_custom_call.1} parent=99 // pred_region
          %s2021 = sand.u32 %s415, 1
          %s2022 = scalar_lea.sflag [#allocation4], %s2021
          %s2023 = sand.u32 %s415, 1
          %s2024 = smul.addr %s2023, 16
          %s2025 = scalar_lea.vmem [#allocation5], %s2024
          %2026 = dma.done %s2022, 256
        $region104: #{tpu_custom_call.1} parent=99 // pred_fallthru
          _
      $region100: #{tpu_custom_call.1} parent=5 // pred_fallthru
        _
    $region6: #{tpu_custom_call.1} parent=1 // loop_footer
      %s33 = sadd.s32 1, %s29
    $region7: #{tpu_custom_call.1} parent=1 // loop_footer_branch
      %28 = sbr.rel target = $region3
    $region8: #{tpu_custom_call.1} parent=1 // loop_exit
      _
    %2027 = vsyncpa [#allocation3], 1
    %s2028 = scalar_lea.sflag [#allocation3], 1
    %2029 = vsyncpa %s2028, 1
    %2030 = vsyncpa [#allocation4], 1
    %s2031 = scalar_lea.sflag [#allocation4], 1
    %2032 = vsyncpa %s2031, 1

</llo_original>
